<compile_context>
chip_gen: v6e
topology: v6e:2x2x1
jax: 0.10.0
libtpu: 0.0.40
codegen_flags: <defaults>
</compile_context>

<pallas_src>
import functools

import jax
import jax.numpy as jnp
import numpy as np
from jax.experimental import pallas as pl
from jax.experimental.pallas import tpu as pltpu


# ----------------------------- kernel helpers ------------------------------

def _layer_norm(x, w, b, eps=1e-5):
    mu = jnp.mean(x, axis=-1, keepdims=True)
    var = jnp.mean((x - mu) ** 2, axis=-1, keepdims=True)
    return (x - mu) * jax.lax.rsqrt(var + eps) * w + b


def _bf16(x):
    return x.astype(jnp.bfloat16)


def _fused_encoder_kernel(num_heads, has_fc, *args):
    """All encoder layers + final LN (+ optional fc) for one batch block.

    grid = (B // B_tile, L); the [B_tile*N, C] activation is resident in
    `acc_ref` (VMEM scratch) across the layer axis.
    """
    if has_fc:
        (x_ref, mask_ref,
         ln1w, ln1b, wqkv, bqkv, wo, bo,
         ln2w, ln2b, w1, b1, w2, b2,
         lnfw, lnfb, fcw, fcb,
         o_ref, acc_ref) = args
    else:
        (x_ref, mask_ref,
         ln1w, ln1b, wqkv, bqkv, wo, bo,
         ln2w, ln2b, w1, b1, w2, b2,
         lnfw, lnfb,
         o_ref, acc_ref) = args
        fcw = fcb = None

    l = pl.program_id(1)
    n_layers = pl.num_programs(1)

    Bt, _, N = mask_ref.shape            # mask block: [B_tile, 1, N]
    BN, C = acc_ref.shape                # BN = B_tile * N
    H = num_heads
    hd = C // H
    scale = 1.0 / float(np.sqrt(hd))

    # TODO(synk): dropout is implemented as eval-mode identity (inference).

    @pl.when(l == 0)
    def _():
        acc_ref[...] = x_ref[...].reshape(BN, C)   # load this batch block

    x = acc_ref[...]                               # [BN, C] f32, layer-resident

    # Additive key-padding bias (f32): valid (1.0) -> 0, padded (0.0) -> -1e30.
    # Replicated over heads so it broadcasts against [H*Bt, N, N] scores.
    mask_bias = (mask_ref[...] - 1.0) * 1e30                       # [Bt, 1, N]
    mask_bias = jnp.broadcast_to(mask_bias[None],
                                 (H, Bt, 1, N)).reshape(H * Bt, 1, N)

    # ---------------- self-attention block (pre-LN) ----------------
    h = _layer_norm(x, ln1w[0], ln1b[0])                           # [BN, C] f32
    # one fused lane-dense projection (bf16 operands, f32 accumulation)
    qkv = jnp.dot(_bf16(h), wqkv[0],
                  preferred_element_type=jnp.float32) + bqkv[0]    # [BN, 3C] f32

    q = (qkv[:, 0 * C:1 * C] * scale).reshape(Bt, N, C)   # scale q, not scores
    k = qkv[:, 1 * C:2 * C].reshape(Bt, N, C)
    v = qkv[:, 2 * C:3 * C].reshape(Bt, N, C)

    def to_heads(t):          # [Bt, N, C] -> [H*Bt, N, hd]  (z = h*Bt + b)
        return jnp.concatenate(
            [t[:, :, i * hd:(i + 1) * hd] for i in range(H)], axis=0)

    qh = to_heads(_bf16(q))
    kh = to_heads(_bf16(k))
    vh = to_heads(_bf16(v))

    s = jnp.einsum('znd,zmd->znm', qh, kh,
                   preferred_element_type=jnp.float32)             # [HB, N, N]
    s = s + mask_bias
    smax = jnp.max(s, axis=-1, keepdims=True)
    p = jnp.exp(s - smax)                        # f32 exp (safe on v5e too)
    row_sum = jnp.sum(p, axis=-1, keepdims=True)                   # [HB, N, 1]

    pv = jnp.einsum('znm,zmd->znd', _bf16(p), vh,
                    preferred_element_type=jnp.float32)            # [HB, N, hd]
    pv = pv * pl.reciprocal(row_sum, approx=True)    # normalize post-PV (EUP)

    # merge heads back onto the lane axis: [H*Bt, N, hd] -> [BN, C]
    pv = jnp.concatenate(
        [pv[i * Bt:(i + 1) * Bt] for i in range(H)], axis=-1)      # [Bt, N, C]
    pv = pv.reshape(BN, C)

    attn = jnp.dot(_bf16(pv), wo[0],
                   preferred_element_type=jnp.float32) + bo[0]     # [BN, C]
    x = x + attn

    # ---------------- feed-forward block (pre-LN) ----------------
    h2 = _layer_norm(x, ln2w[0], ln2b[0])
    f = jnp.dot(_bf16(h2), w1[0], preferred_element_type=jnp.float32) + b1[0]
    f = jnp.maximum(f, 0.0)
    f = jnp.dot(_bf16(f), w2[0], preferred_element_type=jnp.float32) + b2[0]
    x = x + f

    acc_ref[...] = x                               # carry to next layer

    # ---------------- final LayerNorm (+ optional fc) ----------------
    @pl.when(l == n_layers - 1)
    def _():
        y = _layer_norm(x, lnfw[...], lnfb[...])
        if has_fc:
            y = jnp.dot(_bf16(y), fcw[...],
                        preferred_element_type=jnp.float32) + fcb[...]
        o_ref[...] = y.reshape(o_ref.shape)


# ------------------------------ wrapper ------------------------------------

def transformer_encoder_forward(tokens, valid_masks, params, num_heads):
    """tokens: [B, N, C] f32, valid_masks: [B, N] bool (True = valid)."""
    B, N, C = tokens.shape
    L = params["ln1_w"].shape[0]
    F = params["w1"].shape[-1]
    H = num_heads

    if valid_masks is None:
        mask = jnp.ones((B, 1, N), jnp.float32)
    else:
        mask = valid_masks.astype(jnp.float32).reshape(B, 1, N)
    x = tokens.astype(jnp.float32)

    has_fc = params.get("fc_w", None) is not None
    out_C = params["fc_w"].shape[-1] if has_fc else C

    # Weights go to HBM as bf16 (halves weight DMA + weight VMEM); LN params
    # and biases stay f32.
    bf = lambda a: a.astype(jnp.bfloat16)
    layer_args = [
        params["ln1_w"], params["ln1_b"],
        bf(params["wqkv"]), params["bqkv"],
        bf(params["wo"]), params["bo"],
        params["ln2_w"], params["ln2_b"],
        bf(params["w1"]), params["b1"],
        bf(params["w2"]), params["b2"],
    ]
    final_args = [params["lnf_w"], params["lnf_b"]]
    if has_fc:
        final_args += [bf(params["fc_w"]), params["fc_b"]]

    # ---- batch tile: amortize weight DMA and fatten the MXU row dim -------
    vmem_limit = 48 * 1024 * 1024
    weight_bytes = 2 * 2 * (C * 3 * C + C * C + 2 * C * F)  # dbl-buffered bf16
    budget = max(vmem_limit - weight_bytes - (8 << 20), 4 << 20)
    b_tile = 1
    for bt in range(1, B + 1):
        if B % bt:
            continue
        rows = bt * N
        need = rows * (C + 3 * C + F) * 4 + 2 * H * bt * N * N * 4
        if need * 3 <= budget:          # 3x slack for temporaries / spills
            b_tile = bt

    # TODO(synk): C/3C/F/out_C are not padded to multiples of 128 here; for
    # production dims pad wrapper-side (LayerNorm statistics need care).

    def stacked_spec(arr):              # per-layer weights: [L, ...]
        nd = arr.ndim
        return pl.BlockSpec((1,) + arr.shape[1:],
                            lambda b, l, _nd=nd: (l,) + (0,) * (_nd - 1))

    def const_spec(arr):                # final LN / fc weights
        nd = arr.ndim
        return pl.BlockSpec(arr.shape, lambda b, l, _nd=nd: (0,) * _nd)

    in_specs = ([pl.BlockSpec((b_tile, N, C), lambda b, l: (b, 0, 0)),
                 pl.BlockSpec((b_tile, 1, N), lambda b, l: (b, 0, 0))]
                + [stacked_spec(a) for a in layer_args]
                + [const_spec(a) for a in final_args])

    kernel = functools.partial(_fused_encoder_kernel, num_heads, has_fc)

    out = pl.pallas_call(
        kernel,
        out_shape=jax.ShapeDtypeStruct((B, N, out_C), jnp.float32),
        grid=(B // b_tile, L),
        in_specs=in_specs,
        out_specs=pl.BlockSpec((b_tile, N, out_C), lambda b, l: (b, 0, 0)),
        scratch_shapes=[pltpu.VMEM((b_tile * N, C), jnp.float32)],
        compiler_params=pltpu.CompilerParams(
            dimension_semantics=("parallel", "arbitrary"),
            vmem_limit_bytes=vmem_limit),
    )(x, mask, *layer_args, *final_args)
    return out


# --------------------------- parameter init --------------------------------

def init_params(key, d_model, num_heads, ffn_dim, num_layers, out_dim=None):
    C, F, L = d_model, ffn_dim, num_layers

    def rnd(k, shape, s=0.1):
        return s * jax.random.normal(k, shape, jnp.float32)

    keys = jax.random.split(key, 8)
    params = dict(
        ln1_w=jnp.ones((L, 1, C), jnp.float32),
        ln1_b=jnp.zeros((L, 1, C), jnp.float32),
        wqkv=rnd(keys[0], (L, C, 3 * C)),              # fused q|k|v projection
        bqkv=rnd(keys[1], (L, 1, 3 * C), 0.01),        # fused lane-dense bias
        wo=rnd(keys[2], (L, C, C)),                    # merged-head out proj
        bo=rnd(keys[3], (L, 1, C), 0.01),
        ln2_w=jnp.ones((L, 1, C), jnp.float32),
        ln2_b=jnp.zeros((L, 1, C), jnp.float32),
        w1=rnd(keys[4], (L, C, F)), b1=jnp.zeros((L, 1, F), jnp.float32),
        w2=rnd(keys[5], (L, F, C)), b2=jnp.zeros((L, 1, C), jnp.float32),
        lnf_w=jnp.ones((1, C), jnp.float32),
        lnf_b=jnp.zeros((1, C), jnp.float32),
        fc_w=None, fc_b=None,
    )
    if out_dim is not None:
        params["fc_w"] = rnd(keys[6], (C, out_dim))
        params["fc_b"] = rnd(keys[7], (1, out_dim), 0.01)
    return params


# ------------------------- pure-JAX reference -------------------------------

def _ref_forward(tokens, valid_masks, params, num_heads):
    B, N, C = tokens.shape
    H = num_heads
    hd = C // H
    L = params["ln1_w"].shape[0]
    # reference uses the same bf16-rounded weights the kernel streams from HBM
    r = lambda a: a.astype(jnp.bfloat16).astype(jnp.float32)
    if valid_masks is None:
        maskf = jnp.ones((B, N), jnp.float32)
    else:
        maskf = valid_masks.astype(jnp.float32)
    bias = (maskf - 1.0)[:, None, None, :] * 1e30          # [B,1,1,N]
    x = tokens.astype(jnp.float32)
    for l in range(L):
        h = _layer_norm(x, params["ln1_w"][l], params["ln1_b"][l])
        qkv = h @ r(params["wqkv"][l]) + params["bqkv"][l]  # [B,N,3C]
        q = qkv[..., 0 * C:1 * C].reshape(B, N, H, hd)
        k = qkv[..., 1 * C:2 * C].reshape(B, N, H, hd)
        v = qkv[..., 2 * C:3 * C].reshape(B, N, H, hd)
        s = jnp.einsum('bnhd,bmhd->bhnm', q, k) / np.sqrt(hd) + bias
        p = jax.nn.softmax(s, axis=-1)
        a = jnp.einsum('bhnm,bmhd->bnhd', p, v).reshape(B, N, C)
        x = x + a @ r(params["wo"][l]) + params["bo"][l]
        h2 = _layer_norm(x, params["ln2_w"][l], params["ln2_b"][l])
        x = x + jnp.maximum(h2 @ r(params["w1"][l]) + params["b1"][l],
                            0.0) @ r(params["w2"][l]) + params["b2"][l]
    x = _layer_norm(x, params["lnf_w"], params["lnf_b"])
    if params.get("fc_w", None) is not None:
        x = x @ r(params["fc_w"]) + params["fc_b"]
    return x


# --------------------------------- main -------------------------------------

if __name__ == "__main__":
    B, N, C = 2, 8, 32           # batch, seq (num parts), d_model
    num_heads, ffn_dim, num_layers = 4, 64, 2
    out_dim = None               # out_fc = Identity (module default)

    key = jax.random.PRNGKey(0)
    k_tok, k_par = jax.random.split(key)
    tokens = jax.random.normal(k_tok, (B, N, C), jnp.float32)
    valid_masks = jnp.array(
        [[True] * N,
         [True] * (N - 3) + [False] * 3], dtype=bool)        # [B, N]

    params = init_params(k_par, C, num_heads, ffn_dim, num_layers, out_dim)

    out = transformer_encoder_forward(tokens, valid_masks, params, num_heads)
    out = jax.block_until_ready(out)

    ref = _ref_forward(tokens, valid_masks, params, num_heads)
    # tolerance loosened vs a pure-f32 implementation: bf16 MXU operands and
    # the approximate softmax reciprocal.
    np.testing.assert_allclose(np.asarray(out), np.asarray(ref),
                               rtol=3e-2, atol=3e-2)

    print("KERNEL_OK")
</pallas_src>

<mosaic_0001>
module attributes {stable_mosaic.version = 11 : i64} {
  func.func @_fused_encoder_kernel(%arg0: i32, %arg1: i32, %arg2: memref<2x8x32xf32, #tpu.memory_space<vmem>>, %arg3: memref<2x1x8xf32, #tpu.memory_space<vmem>>, %arg4: memref<1x1x32xf32, #tpu.memory_space<vmem>>, %arg5: memref<1x1x32xf32, #tpu.memory_space<vmem>>, %arg6: memref<1x32x96xbf16, #tpu.memory_space<vmem>>, %arg7: memref<1x1x96xf32, #tpu.memory_space<vmem>>, %arg8: memref<1x32x32xbf16, #tpu.memory_space<vmem>>, %arg9: memref<1x1x32xf32, #tpu.memory_space<vmem>>, %arg10: memref<1x1x32xf32, #tpu.memory_space<vmem>>, %arg11: memref<1x1x32xf32, #tpu.memory_space<vmem>>, %arg12: memref<1x32x64xbf16, #tpu.memory_space<vmem>>, %arg13: memref<1x1x64xf32, #tpu.memory_space<vmem>>, %arg14: memref<1x64x32xbf16, #tpu.memory_space<vmem>>, %arg15: memref<1x1x32xf32, #tpu.memory_space<vmem>>, %arg16: memref<1x32xf32, #tpu.memory_space<vmem>>, %arg17: memref<1x32xf32, #tpu.memory_space<vmem>>, %arg18: memref<2x8x32xf32, #tpu.memory_space<vmem>>, %arg19: memref<16x32xf32, #tpu.memory_space<vmem>>) attributes {dimension_semantics = [#tpu.dimension_semantics<parallel>, #tpu.dimension_semantics<arbitrary>], iteration_bounds = array<i64: 1, 2>, scalar_prefetch = 0 : i64, scratch_operands = 1 : i64, tpu.core_type = #tpu.core_type<tc>, window_params = [{transform_indices = @transform_0, window_bounds = array<i64: 2, 8, 32>}, {transform_indices = @transform_1, window_bounds = array<i64: 2, 1, 8>}, {transform_indices = @transform_2, window_bounds = array<i64: 1, 1, 32>}, {transform_indices = @transform_3, window_bounds = array<i64: 1, 1, 32>}, {transform_indices = @transform_4, window_bounds = array<i64: 1, 32, 96>}, {transform_indices = @transform_5, window_bounds = array<i64: 1, 1, 96>}, {transform_indices = @transform_6, window_bounds = array<i64: 1, 32, 32>}, {transform_indices = @transform_7, window_bounds = array<i64: 1, 1, 32>}, {transform_indices = @transform_8, window_bounds = array<i64: 1, 1, 32>}, {transform_indices = @transform_9, window_bounds = array<i64: 1, 1, 32>}, {transform_indices = @transform_10, window_bounds = array<i64: 1, 32, 64>}, {transform_indices = @transform_11, window_bounds = array<i64: 1, 1, 64>}, {transform_indices = @transform_12, window_bounds = array<i64: 1, 64, 32>}, {transform_indices = @transform_13, window_bounds = array<i64: 1, 1, 32>}, {pipeline_mode = #tpu.pipeline_mode<synchronous>, transform_indices = @transform_14, window_bounds = array<i64: 1, 32>}, {pipeline_mode = #tpu.pipeline_mode<synchronous>, transform_indices = @transform_15, window_bounds = array<i64: 1, 32>}, {transform_indices = @transform_16, window_bounds = array<i64: 2, 8, 32>}]} {
    %c0_i32 = arith.constant 0 : i32
    %0 = arith.cmpi eq, %arg1, %c0_i32 : i32
    %1 = arith.extui %0 : i1 to i32
    %c0_i32_0 = arith.constant 0 : i32
    %2 = arith.cmpi ne, %1, %c0_i32_0 : i32
    scf.if %2 {
      %c0_65 = arith.constant 0 : index
      %c0_66 = arith.constant 0 : index
      %c0_67 = arith.constant 0 : index
      %152 = vector.load %arg2[%c0_65, %c0_66, %c0_67] : memref<2x8x32xf32, #tpu.memory_space<vmem>>, vector<2x8x32xf32>
      %153 = vector.shape_cast %152 : vector<2x8x32xf32> to vector<16x32xf32>
      %c0_68 = arith.constant 0 : index
      %c0_69 = arith.constant 0 : index
      %154 = vector.load %arg19[%c0_68, %c0_69] : memref<16x32xf32, #tpu.memory_space<vmem>>, vector<16x32xf32>
      tpu.vector_store %arg19[%c0_68, %c0_69], %153 {strides = array<i32>} : memref<16x32xf32, #tpu.memory_space<vmem>>, vector<16x32xf32>,
    } else {
    }
    %c0 = arith.constant 0 : index
    %c0_1 = arith.constant 0 : index
    %3 = vector.load %arg19[%c0, %c0_1] : memref<16x32xf32, #tpu.memory_space<vmem>>, vector<16x32xf32>
    %c0_2 = arith.constant 0 : index
    %c0_3 = arith.constant 0 : index
    %c0_4 = arith.constant 0 : index
    %4 = vector.load %arg3[%c0_2, %c0_3, %c0_4] : memref<2x1x8xf32, #tpu.memory_space<vmem>>, vector<2x1x8xf32>
    %cst = arith.constant 1.000000e+00 : f32
    %5 = vector.broadcast %cst : f32 to vector<2x1x8xf32>
    %6 = arith.subf %4, %5 : vector<2x1x8xf32>
    %cst_5 = arith.constant 1.000000e+30 : f32
    %7 = vector.broadcast %cst_5 : f32 to vector<2x1x8xf32>
    %8 = arith.mulf %6, %7 : vector<2x1x8xf32>
    %9 = vector.shape_cast %8 : vector<2x1x8xf32> to vector<1x2x1x8xf32>
    %10 = vector.shape_cast %9 : vector<1x2x1x8xf32> to vector<1x2x1x8xf32>
    %11 = vector.broadcast %10 : vector<1x2x1x8xf32> to vector<4x2x1x8xf32>
    %12 = vector.shape_cast %11 : vector<4x2x1x8xf32> to vector<8x1x8xf32>
    %c0_6 = arith.constant 0 : index
    %c0_7 = arith.constant 0 : index
    %c0_8 = arith.constant 0 : index
    %13 = vector.load %arg4[%c0_6, %c0_7, %c0_8] : memref<1x1x32xf32, #tpu.memory_space<vmem>>, vector<1x1x32xf32>
    %14 = vector.shape_cast %13 : vector<1x1x32xf32> to vector<1x32xf32>
    %c0_9 = arith.constant 0 : index
    %c0_10 = arith.constant 0 : index
    %c0_11 = arith.constant 0 : index
    %15 = vector.load %arg5[%c0_9, %c0_10, %c0_11] : memref<1x1x32xf32, #tpu.memory_space<vmem>>, vector<1x1x32xf32>
    %16 = vector.shape_cast %15 : vector<1x1x32xf32> to vector<1x32xf32>
    %cst_12 = arith.constant dense<0.000000e+00> : vector<16xf32>
    %17 = vector.multi_reduction <add>, %3, %cst_12 [1] : vector<16x32xf32> to vector<16xf32>
    %18 = vector.shape_cast %17 : vector<16xf32> to vector<16x1xf32>
    %cst_13 = arith.constant 3.200000e+01 : f32
    %19 = vector.broadcast %cst_13 : f32 to vector<16x1xf32>
    %20 = arith.divf %18, %19 : vector<16x1xf32>
    %21 = vector.broadcast %20 : vector<16x1xf32> to vector<16x32xf32>
    %22 = arith.subf %3, %21 : vector<16x32xf32>
    %23 = arith.mulf %22, %22 : vector<16x32xf32>
    %cst_14 = arith.constant dense<0.000000e+00> : vector<16xf32>
    %24 = vector.multi_reduction <add>, %23, %cst_14 [1] : vector<16x32xf32> to vector<16xf32>
    %25 = vector.shape_cast %24 : vector<16xf32> to vector<16x1xf32>
    %cst_15 = arith.constant 3.200000e+01 : f32
    %26 = vector.broadcast %cst_15 : f32 to vector<16x1xf32>
    %27 = arith.divf %25, %26 : vector<16x1xf32>
    %28 = vector.broadcast %20 : vector<16x1xf32> to vector<16x32xf32>
    %29 = arith.subf %3, %28 : vector<16x32xf32>
    %cst_16 = arith.constant 9.99999974E-6 : f32
    %30 = vector.broadcast %cst_16 : f32 to vector<16x1xf32>
    %31 = arith.addf %27, %30 : vector<16x1xf32>
    %32 = math.rsqrt %31 : vector<16x1xf32>
    %33 = vector.broadcast %32 : vector<16x1xf32> to vector<16x32xf32>
    %34 = arith.mulf %29, %33 : vector<16x32xf32>
    %35 = vector.broadcast %14 : vector<1x32xf32> to vector<16x32xf32>
    %36 = arith.mulf %34, %35 : vector<16x32xf32>
    %37 = vector.broadcast %16 : vector<1x32xf32> to vector<16x32xf32>
    %38 = arith.addf %36, %37 : vector<16x32xf32>
    %39 = arith.truncf %38 : vector<16x32xf32> to vector<16x32xbf16>
    %c0_17 = arith.constant 0 : index
    %c0_18 = arith.constant 0 : index
    %c0_19 = arith.constant 0 : index
    %40 = vector.load %arg6[%c0_17, %c0_18, %c0_19] : memref<1x32x96xbf16, #tpu.memory_space<vmem>>, vector<1x32x96xbf16>
    %41 = vector.shape_cast %40 : vector<1x32x96xbf16> to vector<32x96xbf16>
    %cst_20 = arith.constant dense<0.000000e+00> : vector<16x96xf32>
    %42 = tpu.matmul %39, %41, %cst_20 {dimension_numbers = #tpu.dot_dimension_numbers<[1], [0], [0], [1], [0, 0, 1, 1], [], []>} : vector<16x32xbf16>, vector<32x96xbf16>, vector<16x96xf32> -> vector<16x96xf32>
    %c0_21 = arith.constant 0 : index
    %c0_22 = arith.constant 0 : index
    %c0_23 = arith.constant 0 : index
    %43 = vector.load %arg7[%c0_21, %c0_22, %c0_23] : memref<1x1x96xf32, #tpu.memory_space<vmem>>, vector<1x1x96xf32>
    %44 = vector.shape_cast %43 : vector<1x1x96xf32> to vector<1x96xf32>
    %45 = vector.broadcast %44 : vector<1x96xf32> to vector<16x96xf32>
    %46 = arith.addf %42, %45 : vector<16x96xf32>
    %47 = vector.extract_strided_slice %46 {offsets = [0, 0], sizes = [16, 32], strides = [1, 1]} : vector<16x96xf32> to vector<16x32xf32>
    %cst_24 = arith.constant 0.353553385 : f32
    %48 = vector.broadcast %cst_24 : f32 to vector<16x32xf32>
    %49 = arith.mulf %47, %48 : vector<16x32xf32>
    %50 = vector.shape_cast %49 : vector<16x32xf32> to vector<2x8x32xf32>
    %51 = vector.extract_strided_slice %46 {offsets = [0, 32], sizes = [16, 32], strides = [1, 1]} : vector<16x96xf32> to vector<16x32xf32>
    %52 = vector.shape_cast %51 : vector<16x32xf32> to vector<2x8x32xf32>
    %53 = vector.extract_strided_slice %46 {offsets = [0, 64], sizes = [16, 32], strides = [1, 1]} : vector<16x96xf32> to vector<16x32xf32>
    %54 = vector.shape_cast %53 : vector<16x32xf32> to vector<2x8x32xf32>
    %55 = arith.truncf %50 : vector<2x8x32xf32> to vector<2x8x32xbf16>
    %56 = vector.extract_strided_slice %55 {offsets = [0, 0, 0], sizes = [2, 8, 8], strides = [1, 1, 1]} : vector<2x8x32xbf16> to vector<2x8x8xbf16>
    %57 = vector.extract_strided_slice %55 {offsets = [0, 0, 8], sizes = [2, 8, 8], strides = [1, 1, 1]} : vector<2x8x32xbf16> to vector<2x8x8xbf16>
    %58 = vector.extract_strided_slice %55 {offsets = [0, 0, 16], sizes = [2, 8, 8], strides = [1, 1, 1]} : vector<2x8x32xbf16> to vector<2x8x8xbf16>
    %59 = vector.extract_strided_slice %55 {offsets = [0, 0, 24], sizes = [2, 8, 8], strides = [1, 1, 1]} : vector<2x8x32xbf16> to vector<2x8x8xbf16>
    %60 = tpu.concatenate %56, %57, %58, %59 in 0 : vector<2x8x8xbf16>, vector<2x8x8xbf16>, vector<2x8x8xbf16>, vector<2x8x8xbf16> -> vector<8x8x8xbf16>
    %61 = arith.truncf %52 : vector<2x8x32xf32> to vector<2x8x32xbf16>
    %62 = vector.extract_strided_slice %61 {offsets = [0, 0, 0], sizes = [2, 8, 8], strides = [1, 1, 1]} : vector<2x8x32xbf16> to vector<2x8x8xbf16>
    %63 = vector.extract_strided_slice %61 {offsets = [0, 0, 8], sizes = [2, 8, 8], strides = [1, 1, 1]} : vector<2x8x32xbf16> to vector<2x8x8xbf16>
    %64 = vector.extract_strided_slice %61 {offsets = [0, 0, 16], sizes = [2, 8, 8], strides = [1, 1, 1]} : vector<2x8x32xbf16> to vector<2x8x8xbf16>
    %65 = vector.extract_strided_slice %61 {offsets = [0, 0, 24], sizes = [2, 8, 8], strides = [1, 1, 1]} : vector<2x8x32xbf16> to vector<2x8x8xbf16>
    %66 = tpu.concatenate %62, %63, %64, %65 in 0 : vector<2x8x8xbf16>, vector<2x8x8xbf16>, vector<2x8x8xbf16>, vector<2x8x8xbf16> -> vector<8x8x8xbf16>
    %67 = arith.truncf %54 : vector<2x8x32xf32> to vector<2x8x32xbf16>
    %68 = vector.extract_strided_slice %67 {offsets = [0, 0, 0], sizes = [2, 8, 8], strides = [1, 1, 1]} : vector<2x8x32xbf16> to vector<2x8x8xbf16>
    %69 = vector.extract_strided_slice %67 {offsets = [0, 0, 8], sizes = [2, 8, 8], strides = [1, 1, 1]} : vector<2x8x32xbf16> to vector<2x8x8xbf16>
    %70 = vector.extract_strided_slice %67 {offsets = [0, 0, 16], sizes = [2, 8, 8], strides = [1, 1, 1]} : vector<2x8x32xbf16> to vector<2x8x8xbf16>
    %71 = vector.extract_strided_slice %67 {offsets = [0, 0, 24], sizes = [2, 8, 8], strides = [1, 1, 1]} : vector<2x8x32xbf16> to vector<2x8x8xbf16>
    %72 = tpu.concatenate %68, %69, %70, %71 in 0 : vector<2x8x8xbf16>, vector<2x8x8xbf16>, vector<2x8x8xbf16>, vector<2x8x8xbf16> -> vector<8x8x8xbf16>
    "tpu.trace_start"() <{level = 10 : i32, message = "znd,zmd->znm"}> : () -> ()
    %cst_25 = arith.constant dense<0.000000e+00> : vector<8x8x8xf32>
    %73 = tpu.matmul %60, %66, %cst_25 {dimension_numbers = #tpu.dot_dimension_numbers<[2], [2], [1], [1], [0, 0, 0, 1, 1, 1], [0], [0]>} : vector<8x8x8xbf16>, vector<8x8x8xbf16>, vector<8x8x8xf32> -> vector<8x8x8xf32>
    "tpu.trace_stop"() : () -> ()
    %74 = vector.broadcast %12 : vector<8x1x8xf32> to vector<8x8x8xf32>
    %75 = arith.addf %73, %74 : vector<8x8x8xf32>
    %cst_26 = arith.constant dense<0xFF800000> : vector<8x8xf32>
    %76 = vector.multi_reduction <maximumf>, %75, %cst_26 [2] : vector<8x8x8xf32> to vector<8x8xf32>
    %77 = vector.shape_cast %76 : vector<8x8xf32> to vector<8x8x1xf32>
    %78 = vector.broadcast %77 : vector<8x8x1xf32> to vector<8x8x8xf32>
    %79 = arith.subf %75, %78 : vector<8x8x8xf32>
    %80 = math.exp %79 : vector<8x8x8xf32>
    %cst_27 = arith.constant dense<0.000000e+00> : vector<8x8xf32>
    %81 = vector.multi_reduction <add>, %80, %cst_27 [2] : vector<8x8x8xf32> to vector<8x8xf32>
    %82 = vector.shape_cast %81 : vector<8x8xf32> to vector<8x8x1xf32>
    %83 = arith.truncf %80 : vector<8x8x8xf32> to vector<8x8x8xbf16>
    "tpu.trace_start"() <{level = 10 : i32, message = "znm,zmd->znd"}> : () -> ()
    %cst_28 = arith.constant dense<0.000000e+00> : vector<8x8x8xf32>
    %84 = tpu.matmul %83, %72, %cst_28 {dimension_numbers = #tpu.dot_dimension_numbers<[2], [1], [1], [2], [0, 0, 0, 1, 1, 2], [0], [0]>} : vector<8x8x8xbf16>, vector<8x8x8xbf16>, vector<8x8x8xf32> -> vector<8x8x8xf32>
    "tpu.trace_stop"() : () -> ()
    %85 = tpu.reciprocal %82 {approx = true} : vector<8x8x1xf32> -> vector<8x8x1xf32>
    %86 = vector.broadcast %85 : vector<8x8x1xf32> to vector<8x8x8xf32>
    %87 = arith.mulf %84, %86 : vector<8x8x8xf32>
    %88 = vector.extract_strided_slice %87 {offsets = [0, 0, 0], sizes = [2, 8, 8], strides = [1, 1, 1]} : vector<8x8x8xf32> to vector<2x8x8xf32>
    %89 = vector.extract_strided_slice %87 {offsets = [2, 0, 0], sizes = [2, 8, 8], strides = [1, 1, 1]} : vector<8x8x8xf32> to vector<2x8x8xf32>
    %90 = vector.extract_strided_slice %87 {offsets = [4, 0, 0], sizes = [2, 8, 8], strides = [1, 1, 1]} : vector<8x8x8xf32> to vector<2x8x8xf32>
    %91 = vector.extract_strided_slice %87 {offsets = [6, 0, 0], sizes = [2, 8, 8], strides = [1, 1, 1]} : vector<8x8x8xf32> to vector<2x8x8xf32>
    %92 = tpu.concatenate %88, %89, %90, %91 in 2 : vector<2x8x8xf32>, vector<2x8x8xf32>, vector<2x8x8xf32>, vector<2x8x8xf32> -> vector<2x8x32xf32>
    %93 = vector.shape_cast %92 : vector<2x8x32xf32> to vector<16x32xf32>
    %94 = arith.truncf %93 : vector<16x32xf32> to vector<16x32xbf16>
    %c0_29 = arith.constant 0 : index
    %c0_30 = arith.constant 0 : index
    %c0_31 = arith.constant 0 : index
    %95 = vector.load %arg8[%c0_29, %c0_30, %c0_31] : memref<1x32x32xbf16, #tpu.memory_space<vmem>>, vector<1x32x32xbf16>
    %96 = vector.shape_cast %95 : vector<1x32x32xbf16> to vector<32x32xbf16>
    %cst_32 = arith.constant dense<0.000000e+00> : vector<16x32xf32>
    %97 = tpu.matmul %94, %96, %cst_32 {dimension_numbers = #tpu.dot_dimension_numbers<[1], [0], [0], [1], [0, 0, 1, 1], [], []>} : vector<16x32xbf16>, vector<32x32xbf16>, vector<16x32xf32> -> vector<16x32xf32>
    %c0_33 = arith.constant 0 : index
    %c0_34 = arith.constant 0 : index
    %c0_35 = arith.constant 0 : index
    %98 = vector.load %arg9[%c0_33, %c0_34, %c0_35] : memref<1x1x32xf32, #tpu.memory_space<vmem>>, vector<1x1x32xf32>
    %99 = vector.shape_cast %98 : vector<1x1x32xf32> to vector<1x32xf32>
    %100 = vector.broadcast %99 : vector<1x32xf32> to vector<16x32xf32>
    %101 = arith.addf %97, %100 : vector<16x32xf32>
    %102 = arith.addf %3, %101 : vector<16x32xf32>
    %c0_36 = arith.constant 0 : index
    %c0_37 = arith.constant 0 : index
    %c0_38 = arith.constant 0 : index
    %103 = vector.load %arg10[%c0_36, %c0_37, %c0_38] : memref<1x1x32xf32, #tpu.memory_space<vmem>>, vector<1x1x32xf32>
    %104 = vector.shape_cast %103 : vector<1x1x32xf32> to vector<1x32xf32>
    %c0_39 = arith.constant 0 : index
    %c0_40 = arith.constant 0 : index
    %c0_41 = arith.constant 0 : index
    %105 = vector.load %arg11[%c0_39, %c0_40, %c0_41] : memref<1x1x32xf32, #tpu.memory_space<vmem>>, vector<1x1x32xf32>
    %106 = vector.shape_cast %105 : vector<1x1x32xf32> to vector<1x32xf32>
    %cst_42 = arith.constant dense<0.000000e+00> : vector<16xf32>
    %107 = vector.multi_reduction <add>, %102, %cst_42 [1] : vector<16x32xf32> to vector<16xf32>
    %108 = vector.shape_cast %107 : vector<16xf32> to vector<16x1xf32>
    %cst_43 = arith.constant 3.200000e+01 : f32
    %109 = vector.broadcast %cst_43 : f32 to vector<16x1xf32>
    %110 = arith.divf %108, %109 : vector<16x1xf32>
    %111 = vector.broadcast %110 : vector<16x1xf32> to vector<16x32xf32>
    %112 = arith.subf %102, %111 : vector<16x32xf32>
    %113 = arith.mulf %112, %112 : vector<16x32xf32>
    %cst_44 = arith.constant dense<0.000000e+00> : vector<16xf32>
    %114 = vector.multi_reduction <add>, %113, %cst_44 [1] : vector<16x32xf32> to vector<16xf32>
    %115 = vector.shape_cast %114 : vector<16xf32> to vector<16x1xf32>
    %cst_45 = arith.constant 3.200000e+01 : f32
    %116 = vector.broadcast %cst_45 : f32 to vector<16x1xf32>
    %117 = arith.divf %115, %116 : vector<16x1xf32>
    %118 = vector.broadcast %110 : vector<16x1xf32> to vector<16x32xf32>
    %119 = arith.subf %102, %118 : vector<16x32xf32>
    %cst_46 = arith.constant 9.99999974E-6 : f32
    %120 = vector.broadcast %cst_46 : f32 to vector<16x1xf32>
    %121 = arith.addf %117, %120 : vector<16x1xf32>
    %122 = math.rsqrt %121 : vector<16x1xf32>
    %123 = vector.broadcast %122 : vector<16x1xf32> to vector<16x32xf32>
    %124 = arith.mulf %119, %123 : vector<16x32xf32>
    %125 = vector.broadcast %104 : vector<1x32xf32> to vector<16x32xf32>
    %126 = arith.mulf %124, %125 : vector<16x32xf32>
    %127 = vector.broadcast %106 : vector<1x32xf32> to vector<16x32xf32>
    %128 = arith.addf %126, %127 : vector<16x32xf32>
    %129 = arith.truncf %128 : vector<16x32xf32> to vector<16x32xbf16>
    %c0_47 = arith.constant 0 : index
    %c0_48 = arith.constant 0 : index
    %c0_49 = arith.constant 0 : index
    %130 = vector.load %arg12[%c0_47, %c0_48, %c0_49] : memref<1x32x64xbf16, #tpu.memory_space<vmem>>, vector<1x32x64xbf16>
    %131 = vector.shape_cast %130 : vector<1x32x64xbf16> to vector<32x64xbf16>
    %cst_50 = arith.constant dense<0.000000e+00> : vector<16x64xf32>
    %132 = tpu.matmul %129, %131, %cst_50 {dimension_numbers = #tpu.dot_dimension_numbers<[1], [0], [0], [1], [0, 0, 1, 1], [], []>} : vector<16x32xbf16>, vector<32x64xbf16>, vector<16x64xf32> -> vector<16x64xf32>
    %c0_51 = arith.constant 0 : index
    %c0_52 = arith.constant 0 : index
    %c0_53 = arith.constant 0 : index
    %133 = vector.load %arg13[%c0_51, %c0_52, %c0_53] : memref<1x1x64xf32, #tpu.memory_space<vmem>>, vector<1x1x64xf32>
    %134 = vector.shape_cast %133 : vector<1x1x64xf32> to vector<1x64xf32>
    %135 = vector.broadcast %134 : vector<1x64xf32> to vector<16x64xf32>
    %136 = arith.addf %132, %135 : vector<16x64xf32>
    %cst_54 = arith.constant 0.000000e+00 : f32
    %137 = vector.broadcast %cst_54 : f32 to vector<16x64xf32>
    %138 = arith.maximumf %136, %137 : vector<16x64xf32>
    %139 = arith.truncf %138 : vector<16x64xf32> to vector<16x64xbf16>
    %c0_55 = arith.constant 0 : index
    %c0_56 = arith.constant 0 : index
    %c0_57 = arith.constant 0 : index
    %140 = vector.load %arg14[%c0_55, %c0_56, %c0_57] : memref<1x64x32xbf16, #tpu.memory_space<vmem>>, vector<1x64x32xbf16>
    %141 = vector.shape_cast %140 : vector<1x64x32xbf16> to vector<64x32xbf16>
    %cst_58 = arith.constant dense<0.000000e+00> : vector<16x32xf32>
    %142 = tpu.matmul %139, %141, %cst_58 {dimension_numbers = #tpu.dot_dimension_numbers<[1], [0], [0], [1], [0, 0, 1, 1], [], []>} : vector<16x64xbf16>, vector<64x32xbf16>, vector<16x32xf32> -> vector<16x32xf32>
    %c0_59 = arith.constant 0 : index
    %c0_60 = arith.constant 0 : index
    %c0_61 = arith.constant 0 : index
    %143 = vector.load %arg15[%c0_59, %c0_60, %c0_61] : memref<1x1x32xf32, #tpu.memory_space<vmem>>, vector<1x1x32xf32>
    %144 = vector.shape_cast %143 : vector<1x1x32xf32> to vector<1x32xf32>
    %145 = vector.broadcast %144 : vector<1x32xf32> to vector<16x32xf32>
    %146 = arith.addf %142, %145 : vector<16x32xf32>
    %147 = arith.addf %102, %146 : vector<16x32xf32>
    %c0_62 = arith.constant 0 : index
    %c0_63 = arith.constant 0 : index
    %148 = vector.load %arg19[%c0_62, %c0_63] : memref<16x32xf32, #tpu.memory_space<vmem>>, vector<16x32xf32>
    tpu.vector_store %arg19[%c0_62, %c0_63], %147 {strides = array<i32>} : memref<16x32xf32, #tpu.memory_space<vmem>>, vector<16x32xf32>,
    %c1_i32 = arith.constant 1 : i32
    %149 = arith.cmpi eq, %arg1, %c1_i32 : i32
    %150 = arith.extui %149 : i1 to i32
    %c0_i32_64 = arith.constant 0 : i32
    %151 = arith.cmpi ne, %150, %c0_i32_64 : i32
    scf.if %151 {
      %c0_65 = arith.constant 0 : index
      %c0_66 = arith.constant 0 : index
      %152 = vector.load %arg16[%c0_65, %c0_66] : memref<1x32xf32, #tpu.memory_space<vmem>>, vector<1x32xf32>
      %c0_67 = arith.constant 0 : index
      %c0_68 = arith.constant 0 : index
      %153 = vector.load %arg17[%c0_67, %c0_68] : memref<1x32xf32, #tpu.memory_space<vmem>>, vector<1x32xf32>
      %cst_69 = arith.constant dense<0.000000e+00> : vector<16xf32>
      %154 = vector.multi_reduction <add>, %147, %cst_69 [1] : vector<16x32xf32> to vector<16xf32>
      %155 = vector.shape_cast %154 : vector<16xf32> to vector<16x1xf32>
      %cst_70 = arith.constant 3.200000e+01 : f32
      %156 = vector.broadcast %cst_70 : f32 to vector<16x1xf32>
      %157 = arith.divf %155, %156 : vector<16x1xf32>
      %158 = vector.broadcast %157 : vector<16x1xf32> to vector<16x32xf32>
      %159 = arith.subf %147, %158 : vector<16x32xf32>
      %160 = arith.mulf %159, %159 : vector<16x32xf32>
      %cst_71 = arith.constant dense<0.000000e+00> : vector<16xf32>
      %161 = vector.multi_reduction <add>, %160, %cst_71 [1] : vector<16x32xf32> to vector<16xf32>
      %162 = vector.shape_cast %161 : vector<16xf32> to vector<16x1xf32>
      %cst_72 = arith.constant 3.200000e+01 : f32
      %163 = vector.broadcast %cst_72 : f32 to vector<16x1xf32>
      %164 = arith.divf %162, %163 : vector<16x1xf32>
      %165 = vector.broadcast %157 : vector<16x1xf32> to vector<16x32xf32>
      %166 = arith.subf %147, %165 : vector<16x32xf32>
      %cst_73 = arith.constant 9.99999974E-6 : f32
      %167 = vector.broadcast %cst_73 : f32 to vector<16x1xf32>
      %168 = arith.addf %164, %167 : vector<16x1xf32>
      %169 = math.rsqrt %168 : vector<16x1xf32>
      %170 = vector.broadcast %169 : vector<16x1xf32> to vector<16x32xf32>
      %171 = arith.mulf %166, %170 : vector<16x32xf32>
      %172 = vector.broadcast %152 : vector<1x32xf32> to vector<16x32xf32>
      %173 = arith.mulf %171, %172 : vector<16x32xf32>
      %174 = vector.broadcast %153 : vector<1x32xf32> to vector<16x32xf32>
      %175 = arith.addf %173, %174 : vector<16x32xf32>
      %176 = vector.shape_cast %175 : vector<16x32xf32> to vector<2x8x32xf32>
      %c0_74 = arith.constant 0 : index
      %c0_75 = arith.constant 0 : index
      %c0_76 = arith.constant 0 : index
      %177 = vector.load %arg18[%c0_74, %c0_75, %c0_76] : memref<2x8x32xf32, #tpu.memory_space<vmem>>, vector<2x8x32xf32>
      tpu.vector_store %arg18[%c0_74, %c0_75, %c0_76], %176 {strides = array<i32>} : memref<2x8x32xf32, #tpu.memory_space<vmem>>, vector<2x8x32xf32>,
    } else {
    }
    return
  }
  func.func @transform_0(%arg0: i32, %arg1: i32) -> (i32, i32, i32) {
    %c0_i32 = arith.constant 0 : i32
    %c0_i32_0 = arith.constant 0 : i32
    %c0_i32_1 = arith.constant 0 : i32
    return %arg0, %c0_i32, %c0_i32_0 : i32, i32, i32
  }
  func.func @transform_1(%arg0: i32, %arg1: i32) -> (i32, i32, i32) {
    %c0_i32 = arith.constant 0 : i32
    %c0_i32_0 = arith.constant 0 : i32
    %c0_i32_1 = arith.constant 0 : i32
    return %arg0, %c0_i32, %c0_i32_0 : i32, i32, i32
  }
  func.func @transform_2(%arg0: i32, %arg1: i32) -> (i32, i32, i32) {
    %c0_i32 = arith.constant 0 : i32
    %c0_i32_0 = arith.constant 0 : i32
    %c0_i32_1 = arith.constant 0 : i32
    return %arg1, %c0_i32, %c0_i32_0 : i32, i32, i32
  }
  func.func @transform_3(%arg0: i32, %arg1: i32) -> (i32, i32, i32) {
    %c0_i32 = arith.constant 0 : i32
    %c0_i32_0 = arith.constant 0 : i32
    %c0_i32_1 = arith.constant 0 : i32
    return %arg1, %c0_i32, %c0_i32_0 : i32, i32, i32
  }
  func.func @transform_4(%arg0: i32, %arg1: i32) -> (i32, i32, i32) {
    %c0_i32 = arith.constant 0 : i32
    %c0_i32_0 = arith.constant 0 : i32
    %c0_i32_1 = arith.constant 0 : i32
    return %arg1, %c0_i32, %c0_i32_0 : i32, i32, i32
  }
  func.func @transform_5(%arg0: i32, %arg1: i32) -> (i32, i32, i32) {
    %c0_i32 = arith.constant 0 : i32
    %c0_i32_0 = arith.constant 0 : i32
    %c0_i32_1 = arith.constant 0 : i32
    return %arg1, %c0_i32, %c0_i32_0 : i32, i32, i32
  }
  func.func @transform_6(%arg0: i32, %arg1: i32) -> (i32, i32, i32) {
    %c0_i32 = arith.constant 0 : i32
    %c0_i32_0 = arith.constant 0 : i32
    %c0_i32_1 = arith.constant 0 : i32
    return %arg1, %c0_i32, %c0_i32_0 : i32, i32, i32
  }
  func.func @transform_7(%arg0: i32, %arg1: i32) -> (i32, i32, i32) {
    %c0_i32 = arith.constant 0 : i32
    %c0_i32_0 = arith.constant 0 : i32
    %c0_i32_1 = arith.constant 0 : i32
    return %arg1, %c0_i32, %c0_i32_0 : i32, i32, i32
  }
  func.func @transform_8(%arg0: i32, %arg1: i32) -> (i32, i32, i32) {
    %c0_i32 = arith.constant 0 : i32
    %c0_i32_0 = arith.constant 0 : i32
    %c0_i32_1 = arith.constant 0 : i32
    return %arg1, %c0_i32, %c0_i32_0 : i32, i32, i32
  }
  func.func @transform_9(%arg0: i32, %arg1: i32) -> (i32, i32, i32) {
    %c0_i32 = arith.constant 0 : i32
    %c0_i32_0 = arith.constant 0 : i32
    %c0_i32_1 = arith.constant 0 : i32
    return %arg1, %c0_i32, %c0_i32_0 : i32, i32, i32
  }
  func.func @transform_10(%arg0: i32, %arg1: i32) -> (i32, i32, i32) {
    %c0_i32 = arith.constant 0 : i32
    %c0_i32_0 = arith.constant 0 : i32
    %c0_i32_1 = arith.constant 0 : i32
    return %arg1, %c0_i32, %c0_i32_0 : i32, i32, i32
  }
  func.func @transform_11(%arg0: i32, %arg1: i32) -> (i32, i32, i32) {
    %c0_i32 = arith.constant 0 : i32
    %c0_i32_0 = arith.constant 0 : i32
    %c0_i32_1 = arith.constant 0 : i32
    return %arg1, %c0_i32, %c0_i32_0 : i32, i32, i32
  }
  func.func @transform_12(%arg0: i32, %arg1: i32) -> (i32, i32, i32) {
    %c0_i32 = arith.constant 0 : i32
    %c0_i32_0 = arith.constant 0 : i32
    %c0_i32_1 = arith.constant 0 : i32
    return %arg1, %c0_i32, %c0_i32_0 : i32, i32, i32
  }
  func.func @transform_13(%arg0: i32, %arg1: i32) -> (i32, i32, i32) {
    %c0_i32 = arith.constant 0 : i32
    %c0_i32_0 = arith.constant 0 : i32
    %c0_i32_1 = arith.constant 0 : i32
    return %arg1, %c0_i32, %c0_i32_0 : i32, i32, i32
  }
  func.func @transform_14(%arg0: i32, %arg1: i32) -> (i32, i32) {
    %c0_i32 = arith.constant 0 : i32
    %c0_i32_0 = arith.constant 0 : i32
    %c0_i32_1 = arith.constant 0 : i32
    return %c0_i32, %c0_i32_0 : i32, i32
  }
  func.func @transform_15(%arg0: i32, %arg1: i32) -> (i32, i32) {
    %c0_i32 = arith.constant 0 : i32
    %c0_i32_0 = arith.constant 0 : i32
    %c0_i32_1 = arith.constant 0 : i32
    return %c0_i32, %c0_i32_0 : i32, i32
  }
  func.func @transform_16(%arg0: i32, %arg1: i32) -> (i32, i32, i32) {
    %c0_i32 = arith.constant 0 : i32
    %c0_i32_0 = arith.constant 0 : i32
    %c0_i32_1 = arith.constant 0 : i32
    return %arg0, %c0_i32, %c0_i32_0 : i32, i32, i32
  }
}

</mosaic_0001>

<llo_original>
// kernel: tpu_custom_call.1
$region0: #{tpu_custom_call.1}
  #allocation0 [shape = 'u32[]', space=smem, size = 0x4, offset = 0x4, fixed_abs, tag = 'smem constant byte address 0x4 - core index']
  #allocation1 [shape = 'u32[144,128]{1,0:T(1,128)}', space=vmem, size = 0x12000, scoped, tag = 'internal scratch']
  #allocation2 [shape = 'f32[16,32]{1,0:T(8,128)}', space=vmem, size = 0x2000, scoped, tag = 'scratch operand']
  %s0 = inlined_call_operand.hbm [shape: f32[2,8,32], index: 0, kind: input, shape index: {}]
  %s1 = inlined_call_operand.hbm [shape: f32[2,1,8], index: 1, kind: input, shape index: {}]
  %s2 = inlined_call_operand.vmem [shape: f32[2,1,32], index: 2, kind: input, shape index: {}]
  %s3 = inlined_call_operand.vmem [shape: f32[2,1,32], index: 3, kind: input, shape index: {}]
  %s4 = inlined_call_operand.vmem [shape: bf16[2,32,96], index: 4, kind: input, shape index: {}]
  %s5 = inlined_call_operand.vmem [shape: f32[2,1,96], index: 5, kind: input, shape index: {}]
  %s6 = inlined_call_operand.vmem [shape: bf16[2,32,32], index: 6, kind: input, shape index: {}]
  %s7 = inlined_call_operand.vmem [shape: f32[2,1,32], index: 7, kind: input, shape index: {}]
  %s8 = inlined_call_operand.vmem [shape: f32[2,1,32], index: 8, kind: input, shape index: {}]
  %s9 = inlined_call_operand.vmem [shape: f32[2,1,32], index: 9, kind: input, shape index: {}]
  %s10 = inlined_call_operand.vmem [shape: bf16[2,32,64], index: 10, kind: input, shape index: {}]
  %s11 = inlined_call_operand.vmem [shape: f32[2,1,64], index: 11, kind: input, shape index: {}]
  %s12 = inlined_call_operand.vmem [shape: bf16[2,64,32], index: 12, kind: input, shape index: {}]
  %s13 = inlined_call_operand.vmem [shape: f32[2,1,32], index: 13, kind: input, shape index: {}]
  %s14 = inlined_call_operand.vmem [shape: f32[1,32], index: 14, kind: input, shape index: {}]
  %s15 = inlined_call_operand.vmem [shape: f32[1,32], index: 15, kind: input, shape index: {}]
  %s16 = inlined_call_operand.hbm [shape: f32[2,8,32], index: 16, kind: output, shape index: {}]
  %s17 = sld [smem:[#allocation0]]
  $region113: #{tpu_custom_call.1} parent=0
    _
  %s19 = ssub.s32 1, %s17
  %s20 = scalar_select 0, %s19, %s17
  $region1: #{tpu_custom_call.1} parent=0
    #allocation3 [shape = 'u8[8192]{0}', space=vmem, size = 0x2000, scoped, tag = 'input window, operand 0, single buffered']
    #allocation4 [shape = 's32[2]{0}', space=sflag, size = 0x8, scoped, tag = 'scoped memory for tpu_custom_call.1']
    #allocation5 [shape = 's32[2]{0}', space=sflag, size = 0x8, scoped, tag = 'scoped memory for tpu_custom_call.1']
    #allocation6 [shape = 'u8[1024]{0}', space=vmem, size = 0x400, scoped, tag = 'input window, operand 1, single buffered']
    #allocation7 [shape = 's32[1]{0}', space=sflag, size = 0x4, scoped, tag = 'scoped memory for tpu_custom_call.1']
    #allocation8 [shape = 'u8[8192]{0}', space=vmem, size = 0x2000, scoped, tag = 'output window, operand 0, single buffered']
    %21 = vsyncpa [#allocation4], 0
    %22 = vsyncpa [#allocation7], 0
    %23 = vsyncpa [#allocation5], 0
    loop: start=0, step=1, limit=4
    $region2: #{tpu_custom_call.1} parent=1 // loop_pre_header
      _
    $region3: #{tpu_custom_call.1} parent=1 // loop_header
      %s25 = sphi 0, %s29
      %p26 = scmp.ge.s32.totalorder %s25, 4
      %s32 = sphi 0, %s44
      %s33 = sphi 0, %s40
      %s34 = sphi 0, %s32
      %s35 = sphi 0, %s33
      %s36 = sphi 0, %s34
      %s37 = sphi 0, %s35
      %s47 = sphi 0, %s49
      %s50 = sphi 0, %s47
      %s51 = sphi 0, %s50
      %s67 = sphi 0, %s51
      %s73 = sphi 0, %s75
      %s76 = sphi 0, %s73
      %s77 = sphi 0, %s76
      %s93 = sphi 0, %s77
      %s99 = sphi 0, %s101
      %s102 = sphi 0, %s99
      %s103 = sphi 0, %s102
      %s119 = sphi 0, %s103
      %s125 = sphi 0, %s127
      %s128 = sphi 0, %s125
      %s129 = sphi 0, %s128
      %s145 = sphi 0, %s129
      %s151 = sphi 0, %s153
      %s154 = sphi 0, %s151
      %s155 = sphi 0, %s154
      %s171 = sphi 0, %s155
      %s177 = sphi 0, %s179
      %s180 = sphi 0, %s177
      %s181 = sphi 0, %s180
      %s197 = sphi 0, %s181
      %s203 = sphi 0, %s205
      %s206 = sphi 0, %s203
      %s207 = sphi 0, %s206
      %s223 = sphi 0, %s207
      %s229 = sphi 0, %s231
      %s232 = sphi 0, %s229
      %s233 = sphi 0, %s232
      %s249 = sphi 0, %s233
      %s255 = sphi 0, %s257
      %s258 = sphi 0, %s255
      %s259 = sphi 0, %s258
      %s275 = sphi 0, %s259
      %s281 = sphi 0, %s283
      %s284 = sphi 0, %s281
      %s285 = sphi 0, %s284
      %s301 = sphi 0, %s285
      %s307 = sphi 0, %s309
      %s310 = sphi 0, %s307
      %s311 = sphi 0, %s310
      %s327 = sphi 0, %s311
      %s333 = sphi 0, %s335
      %s336 = sphi 0, %s333
      %s337 = sphi 0, %s336
      %s353 = sphi 0, %s337
      %s359 = sphi 0, %s361
      %s362 = sphi 0, %s359
      %s363 = sphi 0, %s362
      %s379 = sphi 0, %s363
      %s385 = sphi 0, %s387
      %s388 = sphi 0, %s385
      %s389 = sphi 0, %s388
      %s405 = sphi 0, %s389
      %s409 = sphi 0, %s409
      %s411 = sphi 0, %s409
      %s412 = sphi 0, %s411
      %s426 = sphi 0, %s412
      %s430 = sphi 0, %s430
      %s432 = sphi 0, %s430
      %s433 = sphi 0, %s432
      %s447 = sphi 0, %s433
      %s453 = sphi 0, %s455
      %s456 = sphi 0, %s453
      %s457 = sphi 0, %s456
      %s473 = sphi 0, %s457
    $region4: #{tpu_custom_call.1} parent=1 // loop_header_branch
      %28 = sbr.rel (%p26) target = $region8
    $region5: #{tpu_custom_call.1} parent=1 // loop_body
      %s30 = ssub.s32 %s25, 1
      %s31 = ssub.s32 %s25, 2
      %s38 = sadd.s32 1, %s33
      %p39 = scmp.ge.s32.totalorder %s38, 2
      %s40 = scalar_select %p39, 0, %s38
      %s41 = sadd.s32 1, %s32
      %s42 = scalar_select %p39, %s41, %s32
      %p43 = scmp.ge.s32.totalorder %s42, 1
      %s44 = scalar_select %p43, 0, %s42
      %s45 = ssub.s32 %s32, %s44
      %p46 = scmp.eq.s32.totalorder %s45, 0
      %s48 = sadd.s32 %s47, 1
      %s49 = scalar_select %p46, %s47, %s48
      %p52 = pneg %p46
      %p53 = scmp.eq.s32.totalorder %s25, 1
      %p54 = por %p52, %p53
      %p55 = scmp.ne.s32.totalorder %s47, %s50
      %p56 = scmp.eq.s32.totalorder %s25, 0
      %p57 = por %p55, %p56
      %p58 = scmp.ne.s32.totalorder %s47, %s50
      %p59 = scmp.eq.s32.totalorder %s30, 1
      %p60 = por %p58, %p59
      %p61 = scmp.ne.s32.totalorder %s50, %s51
      %p62 = scmp.eq.s32.totalorder %s30, 0
      %p63 = por %p61, %p62
      %p64 = scmp.ne.s32.totalorder %s50, %s51
      %p65 = scmp.eq.s32.totalorder %s31, 1
      %p66 = por %p64, %p65
      %p68 = scmp.ne.s32.totalorder %s51, %s67
      %p69 = scmp.eq.s32.totalorder %s31, 0
      %p70 = por %p68, %p69
      %s71 = ssub.s32 %s32, %s44
      %p72 = scmp.eq.s32.totalorder %s71, 0
      %s74 = sadd.s32 %s73, 1
      %s75 = scalar_select %p72, %s73, %s74
      %p78 = pneg %p72
      %p79 = scmp.eq.s32.totalorder %s25, 1
      %p80 = por %p78, %p79
      %p81 = scmp.ne.s32.totalorder %s73, %s76
      %p82 = scmp.eq.s32.totalorder %s25, 0
      %p83 = por %p81, %p82
      %p84 = scmp.ne.s32.totalorder %s73, %s76
      %p85 = scmp.eq.s32.totalorder %s30, 1
      %p86 = por %p84, %p85
      %p87 = scmp.ne.s32.totalorder %s76, %s77
      %p88 = scmp.eq.s32.totalorder %s30, 0
      %p89 = por %p87, %p88
      %p90 = scmp.ne.s32.totalorder %s76, %s77
      %p91 = scmp.eq.s32.totalorder %s31, 1
      %p92 = por %p90, %p91
      %p94 = scmp.ne.s32.totalorder %s77, %s93
      %p95 = scmp.eq.s32.totalorder %s31, 0
      %p96 = por %p94, %p95
      %s97 = ssub.s32 %s33, %s40
      %p98 = scmp.eq.s32.totalorder %s97, 0
      %s100 = sadd.s32 %s99, 1
      %s101 = scalar_select %p98, %s99, %s100
      %p104 = pneg %p98
      %p105 = scmp.eq.s32.totalorder %s25, 1
      %p106 = por %p104, %p105
      %p107 = scmp.ne.s32.totalorder %s99, %s102
      %p108 = scmp.eq.s32.totalorder %s25, 0
      %p109 = por %p107, %p108
      %p110 = scmp.ne.s32.totalorder %s99, %s102
      %p111 = scmp.eq.s32.totalorder %s30, 1
      %p112 = por %p110, %p111
      %p113 = scmp.ne.s32.totalorder %s102, %s103
      %p114 = scmp.eq.s32.totalorder %s30, 0
      %p115 = por %p113, %p114
      %p116 = scmp.ne.s32.totalorder %s102, %s103
      %p117 = scmp.eq.s32.totalorder %s31, 1
      %p118 = por %p116, %p117
      %p120 = scmp.ne.s32.totalorder %s103, %s119
      %p121 = scmp.eq.s32.totalorder %s31, 0
      %p122 = por %p120, %p121
      %s123 = ssub.s32 %s33, %s40
      %p124 = scmp.eq.s32.totalorder %s123, 0
      %s126 = sadd.s32 %s125, 1
      %s127 = scalar_select %p124, %s125, %s126
      %p130 = pneg %p124
      %p131 = scmp.eq.s32.totalorder %s25, 1
      %p132 = por %p130, %p131
      %p133 = scmp.ne.s32.totalorder %s125, %s128
      %p134 = scmp.eq.s32.totalorder %s25, 0
      %p135 = por %p133, %p134
      %p136 = scmp.ne.s32.totalorder %s125, %s128
      %p137 = scmp.eq.s32.totalorder %s30, 1
      %p138 = por %p136, %p137
      %p139 = scmp.ne.s32.totalorder %s128, %s129
      %p140 = scmp.eq.s32.totalorder %s30, 0
      %p141 = por %p139, %p140
      %p142 = scmp.ne.s32.totalorder %s128, %s129
      %p143 = scmp.eq.s32.totalorder %s31, 1
      %p144 = por %p142, %p143
      %p146 = scmp.ne.s32.totalorder %s129, %s145
      %p147 = scmp.eq.s32.totalorder %s31, 0
      %p148 = por %p146, %p147
      %s149 = ssub.s32 %s33, %s40
      %p150 = scmp.eq.s32.totalorder %s149, 0
      %s152 = sadd.s32 %s151, 1
      %s153 = scalar_select %p150, %s151, %s152
      %p156 = pneg %p150
      %p157 = scmp.eq.s32.totalorder %s25, 1
      %p158 = por %p156, %p157
      %p159 = scmp.ne.s32.totalorder %s151, %s154
      %p160 = scmp.eq.s32.totalorder %s25, 0
      %p161 = por %p159, %p160
      %p162 = scmp.ne.s32.totalorder %s151, %s154
      %p163 = scmp.eq.s32.totalorder %s30, 1
      %p164 = por %p162, %p163
      %p165 = scmp.ne.s32.totalorder %s154, %s155
      %p166 = scmp.eq.s32.totalorder %s30, 0
      %p167 = por %p165, %p166
      %p168 = scmp.ne.s32.totalorder %s154, %s155
      %p169 = scmp.eq.s32.totalorder %s31, 1
      %p170 = por %p168, %p169
      %p172 = scmp.ne.s32.totalorder %s155, %s171
      %p173 = scmp.eq.s32.totalorder %s31, 0
      %p174 = por %p172, %p173
      %s175 = ssub.s32 %s33, %s40
      %p176 = scmp.eq.s32.totalorder %s175, 0
      %s178 = sadd.s32 %s177, 1
      %s179 = scalar_select %p176, %s177, %s178
      %p182 = pneg %p176
      %p183 = scmp.eq.s32.totalorder %s25, 1
      %p184 = por %p182, %p183
      %p185 = scmp.ne.s32.totalorder %s177, %s180
      %p186 = scmp.eq.s32.totalorder %s25, 0
      %p187 = por %p185, %p186
      %p188 = scmp.ne.s32.totalorder %s177, %s180
      %p189 = scmp.eq.s32.totalorder %s30, 1
      %p190 = por %p188, %p189
      %p191 = scmp.ne.s32.totalorder %s180, %s181
      %p192 = scmp.eq.s32.totalorder %s30, 0
      %p193 = por %p191, %p192
      %p194 = scmp.ne.s32.totalorder %s180, %s181
      %p195 = scmp.eq.s32.totalorder %s31, 1
      %p196 = por %p194, %p195
      %p198 = scmp.ne.s32.totalorder %s181, %s197
      %p199 = scmp.eq.s32.totalorder %s31, 0
      %p200 = por %p198, %p199
      %s201 = ssub.s32 %s33, %s40
      %p202 = scmp.eq.s32.totalorder %s201, 0
      %s204 = sadd.s32 %s203, 1
      %s205 = scalar_select %p202, %s203, %s204
      %p208 = pneg %p202
      %p209 = scmp.eq.s32.totalorder %s25, 1
      %p210 = por %p208, %p209
      %p211 = scmp.ne.s32.totalorder %s203, %s206
      %p212 = scmp.eq.s32.totalorder %s25, 0
      %p213 = por %p211, %p212
      %p214 = scmp.ne.s32.totalorder %s203, %s206
      %p215 = scmp.eq.s32.totalorder %s30, 1
      %p216 = por %p214, %p215
      %p217 = scmp.ne.s32.totalorder %s206, %s207
      %p218 = scmp.eq.s32.totalorder %s30, 0
      %p219 = por %p217, %p218
      %p220 = scmp.ne.s32.totalorder %s206, %s207
      %p221 = scmp.eq.s32.totalorder %s31, 1
      %p222 = por %p220, %p221
      %p224 = scmp.ne.s32.totalorder %s207, %s223
      %p225 = scmp.eq.s32.totalorder %s31, 0
      %p226 = por %p224, %p225
      %s227 = ssub.s32 %s33, %s40
      %p228 = scmp.eq.s32.totalorder %s227, 0
      %s230 = sadd.s32 %s229, 1
      %s231 = scalar_select %p228, %s229, %s230
      %p234 = pneg %p228
      %p235 = scmp.eq.s32.totalorder %s25, 1
      %p236 = por %p234, %p235
      %p237 = scmp.ne.s32.totalorder %s229, %s232
      %p238 = scmp.eq.s32.totalorder %s25, 0
      %p239 = por %p237, %p238
      %p240 = scmp.ne.s32.totalorder %s229, %s232
      %p241 = scmp.eq.s32.totalorder %s30, 1
      %p242 = por %p240, %p241
      %p243 = scmp.ne.s32.totalorder %s232, %s233
      %p244 = scmp.eq.s32.totalorder %s30, 0
      %p245 = por %p243, %p244
      %p246 = scmp.ne.s32.totalorder %s232, %s233
      %p247 = scmp.eq.s32.totalorder %s31, 1
      %p248 = por %p246, %p247
      %p250 = scmp.ne.s32.totalorder %s233, %s249
      %p251 = scmp.eq.s32.totalorder %s31, 0
      %p252 = por %p250, %p251
      %s253 = ssub.s32 %s33, %s40
      %p254 = scmp.eq.s32.totalorder %s253, 0
      %s256 = sadd.s32 %s255, 1
      %s257 = scalar_select %p254, %s255, %s256
      %p260 = pneg %p254
      %p261 = scmp.eq.s32.totalorder %s25, 1
      %p262 = por %p260, %p261
      %p263 = scmp.ne.s32.totalorder %s255, %s258
      %p264 = scmp.eq.s32.totalorder %s25, 0
      %p265 = por %p263, %p264
      %p266 = scmp.ne.s32.totalorder %s255, %s258
      %p267 = scmp.eq.s32.totalorder %s30, 1
      %p268 = por %p266, %p267
      %p269 = scmp.ne.s32.totalorder %s258, %s259
      %p270 = scmp.eq.s32.totalorder %s30, 0
      %p271 = por %p269, %p270
      %p272 = scmp.ne.s32.totalorder %s258, %s259
      %p273 = scmp.eq.s32.totalorder %s31, 1
      %p274 = por %p272, %p273
      %p276 = scmp.ne.s32.totalorder %s259, %s275
      %p277 = scmp.eq.s32.totalorder %s31, 0
      %p278 = por %p276, %p277
      %s279 = ssub.s32 %s33, %s40
      %p280 = scmp.eq.s32.totalorder %s279, 0
      %s282 = sadd.s32 %s281, 1
      %s283 = scalar_select %p280, %s281, %s282
      %p286 = pneg %p280
      %p287 = scmp.eq.s32.totalorder %s25, 1
      %p288 = por %p286, %p287
      %p289 = scmp.ne.s32.totalorder %s281, %s284
      %p290 = scmp.eq.s32.totalorder %s25, 0
      %p291 = por %p289, %p290
      %p292 = scmp.ne.s32.totalorder %s281, %s284
      %p293 = scmp.eq.s32.totalorder %s30, 1
      %p294 = por %p292, %p293
      %p295 = scmp.ne.s32.totalorder %s284, %s285
      %p296 = scmp.eq.s32.totalorder %s30, 0
      %p297 = por %p295, %p296
      %p298 = scmp.ne.s32.totalorder %s284, %s285
      %p299 = scmp.eq.s32.totalorder %s31, 1
      %p300 = por %p298, %p299
      %p302 = scmp.ne.s32.totalorder %s285, %s301
      %p303 = scmp.eq.s32.totalorder %s31, 0
      %p304 = por %p302, %p303
      %s305 = ssub.s32 %s33, %s40
      %p306 = scmp.eq.s32.totalorder %s305, 0
      %s308 = sadd.s32 %s307, 1
      %s309 = scalar_select %p306, %s307, %s308
      %p312 = pneg %p306
      %p313 = scmp.eq.s32.totalorder %s25, 1
      %p314 = por %p312, %p313
      %p315 = scmp.ne.s32.totalorder %s307, %s310
      %p316 = scmp.eq.s32.totalorder %s25, 0
      %p317 = por %p315, %p316
      %p318 = scmp.ne.s32.totalorder %s307, %s310
      %p319 = scmp.eq.s32.totalorder %s30, 1
      %p320 = por %p318, %p319
      %p321 = scmp.ne.s32.totalorder %s310, %s311
      %p322 = scmp.eq.s32.totalorder %s30, 0
      %p323 = por %p321, %p322
      %p324 = scmp.ne.s32.totalorder %s310, %s311
      %p325 = scmp.eq.s32.totalorder %s31, 1
      %p326 = por %p324, %p325
      %p328 = scmp.ne.s32.totalorder %s311, %s327
      %p329 = scmp.eq.s32.totalorder %s31, 0
      %p330 = por %p328, %p329
      %s331 = ssub.s32 %s33, %s40
      %p332 = scmp.eq.s32.totalorder %s331, 0
      %s334 = sadd.s32 %s333, 1
      %s335 = scalar_select %p332, %s333, %s334
      %p338 = pneg %p332
      %p339 = scmp.eq.s32.totalorder %s25, 1
      %p340 = por %p338, %p339
      %p341 = scmp.ne.s32.totalorder %s333, %s336
      %p342 = scmp.eq.s32.totalorder %s25, 0
      %p343 = por %p341, %p342
      %p344 = scmp.ne.s32.totalorder %s333, %s336
      %p345 = scmp.eq.s32.totalorder %s30, 1
      %p346 = por %p344, %p345
      %p347 = scmp.ne.s32.totalorder %s336, %s337
      %p348 = scmp.eq.s32.totalorder %s30, 0
      %p349 = por %p347, %p348
      %p350 = scmp.ne.s32.totalorder %s336, %s337
      %p351 = scmp.eq.s32.totalorder %s31, 1
      %p352 = por %p350, %p351
      %p354 = scmp.ne.s32.totalorder %s337, %s353
      %p355 = scmp.eq.s32.totalorder %s31, 0
      %p356 = por %p354, %p355
      %s357 = ssub.s32 %s33, %s40
      %p358 = scmp.eq.s32.totalorder %s357, 0
      %s360 = sadd.s32 %s359, 1
      %s361 = scalar_select %p358, %s359, %s360
      %p364 = pneg %p358
      %p365 = scmp.eq.s32.totalorder %s25, 1
      %p366 = por %p364, %p365
      %p367 = scmp.ne.s32.totalorder %s359, %s362
      %p368 = scmp.eq.s32.totalorder %s25, 0
      %p369 = por %p367, %p368
      %p370 = scmp.ne.s32.totalorder %s359, %s362
      %p371 = scmp.eq.s32.totalorder %s30, 1
      %p372 = por %p370, %p371
      %p373 = scmp.ne.s32.totalorder %s362, %s363
      %p374 = scmp.eq.s32.totalorder %s30, 0
      %p375 = por %p373, %p374
      %p376 = scmp.ne.s32.totalorder %s362, %s363
      %p377 = scmp.eq.s32.totalorder %s31, 1
      %p378 = por %p376, %p377
      %p380 = scmp.ne.s32.totalorder %s363, %s379
      %p381 = scmp.eq.s32.totalorder %s31, 0
      %p382 = por %p380, %p381
      %s383 = ssub.s32 %s33, %s40
      %p384 = scmp.eq.s32.totalorder %s383, 0
      %s386 = sadd.s32 %s385, 1
      %s387 = scalar_select %p384, %s385, %s386
      %p390 = pneg %p384
      %p391 = scmp.eq.s32.totalorder %s25, 1
      %p392 = por %p390, %p391
      %p393 = scmp.ne.s32.totalorder %s385, %s388
      %p394 = scmp.eq.s32.totalorder %s25, 0
      %p395 = por %p393, %p394
      %p396 = scmp.ne.s32.totalorder %s385, %s388
      %p397 = scmp.eq.s32.totalorder %s30, 1
      %p398 = por %p396, %p397
      %p399 = scmp.ne.s32.totalorder %s388, %s389
      %p400 = scmp.eq.s32.totalorder %s30, 0
      %p401 = por %p399, %p400
      %p402 = scmp.ne.s32.totalorder %s388, %s389
      %p403 = scmp.eq.s32.totalorder %s31, 1
      %p404 = por %p402, %p403
      %p406 = scmp.ne.s32.totalorder %s389, %s405
      %p407 = scmp.eq.s32.totalorder %s31, 0
      %p408 = por %p406, %p407
      %s410 = sadd.s32 %s409, 1
      %p413 = scmp.eq.s32.totalorder %s25, 1
      %p414 = scmp.ne.s32.totalorder %s409, %s411
      %p415 = scmp.eq.s32.totalorder %s25, 0
      %p416 = por %p414, %p415
      %p417 = scmp.ne.s32.totalorder %s409, %s411
      %p418 = scmp.eq.s32.totalorder %s30, 1
      %p419 = por %p417, %p418
      %p420 = scmp.ne.s32.totalorder %s411, %s412
      %p421 = scmp.eq.s32.totalorder %s30, 0
      %p422 = por %p420, %p421
      %p423 = scmp.ne.s32.totalorder %s411, %s412
      %p424 = scmp.eq.s32.totalorder %s31, 1
      %p425 = por %p423, %p424
      %p427 = scmp.ne.s32.totalorder %s412, %s426
      %p428 = scmp.eq.s32.totalorder %s31, 0
      %p429 = por %p427, %p428
      %s431 = sadd.s32 %s430, 1
      %p434 = scmp.eq.s32.totalorder %s25, 1
      %p435 = scmp.ne.s32.totalorder %s430, %s432
      %p436 = scmp.eq.s32.totalorder %s25, 0
      %p437 = por %p435, %p436
      %p438 = scmp.ne.s32.totalorder %s430, %s432
      %p439 = scmp.eq.s32.totalorder %s30, 1
      %p440 = por %p438, %p439
      %p441 = scmp.ne.s32.totalorder %s432, %s433
      %p442 = scmp.eq.s32.totalorder %s30, 0
      %p443 = por %p441, %p442
      %p444 = scmp.ne.s32.totalorder %s432, %s433
      %p445 = scmp.eq.s32.totalorder %s31, 1
      %p446 = por %p444, %p445
      %p448 = scmp.ne.s32.totalorder %s433, %s447
      %p449 = scmp.eq.s32.totalorder %s31, 0
      %p450 = por %p448, %p449
      %s451 = ssub.s32 %s32, %s44
      %p452 = scmp.eq.s32.totalorder %s451, 0
      %s454 = sadd.s32 %s453, 1
      %s455 = scalar_select %p452, %s453, %s454
      %p458 = pneg %p452
      %p459 = scmp.eq.s32.totalorder %s25, 1
      %p460 = por %p458, %p459
      %p461 = scmp.ne.s32.totalorder %s453, %s456
      %p462 = scmp.eq.s32.totalorder %s25, 0
      %p463 = por %p461, %p462
      %p464 = scmp.ne.s32.totalorder %s453, %s456
      %p465 = scmp.eq.s32.totalorder %s30, 1
      %p466 = por %p464, %p465
      %p467 = scmp.ne.s32.totalorder %s456, %s457
      %p468 = scmp.eq.s32.totalorder %s30, 0
      %p469 = por %p467, %p468
      %p470 = scmp.ne.s32.totalorder %s456, %s457
      %p471 = scmp.eq.s32.totalorder %s31, 1
      %p472 = por %p470, %p471
      %p474 = scmp.ne.s32.totalorder %s457, %s473
      %p475 = scmp.eq.s32.totalorder %s31, 0
      %p476 = por %p474, %p475
      %p477 = scmp.le.s32.totalorder 1, %s25
      %p478 = scmp.lt.s32.totalorder %s25, 3
      %p479 = pnand %p477, %p478
      %p480 = pneg %p479
      // Predicated region
      $region9: #{tpu_custom_call.1} parent=5 // pred_check
        _
      $region10: #{tpu_custom_call.1} parent=5 // pred_check_branch
        %482 = sbr.rel (%p479) target = $region12
      $region11: #{tpu_custom_call.1} parent=5 // pred_region
        %s483 = ssub.s32 %s25, 1
        // Predicated region
        $region13: #{tpu_custom_call.1} parent=11 // pred_check
          %p484 = pneg %p63
        $region14: #{tpu_custom_call.1} parent=11 // pred_check_branch
          %486 = sbr.rel (%p484) target = $region16
        $region15: #{tpu_custom_call.1} parent=11 // pred_region
          %s487 = smul.u32 2, %s34
          %s489 = ssub.s32 256, 256
          %490 = vsyncadd [#allocation4], %s489
          %s491 = smul.addr %s487, 128
          %s492 = scalar_lea.hbm %s0, %s491
          %s493 = sshll.u32 [#allocation3], 4
          %s494 = int_to_ptr.vmem [resolvable:$true] %s493
          %499 = dma.hbm_to_vmem [thread:$0]  %s492, 256, %s494, [#allocation4], 128, 128, 8
        $region16: #{tpu_custom_call.1} parent=11 // pred_fallthru
          _
        // Predicated region
        $region17: #{tpu_custom_call.1} parent=11 // pred_check
          %p500 = pneg %p89
        $region18: #{tpu_custom_call.1} parent=11 // pred_check_branch
          %502 = sbr.rel (%p500) target = $region20
        $region19: #{tpu_custom_call.1} parent=11 // pred_region
          %s503 = smul.u32 2, %s34
          %s505 = ssub.s32 32, 32
          %506 = vsyncadd [#allocation7], %s505
          %s507 = smul.addr %s503, 16
          %s508 = scalar_lea.hbm %s1, %s507
          %s509 = sshll.u32 [#allocation6], 4
          %s510 = int_to_ptr.vmem [resolvable:$true] %s509
          %515 = dma.hbm_to_vmem [thread:$0]  %s508, 32, %s510, [#allocation7], 16, 16, 1
        $region20: #{tpu_custom_call.1} parent=11 // pred_fallthru
          _
        // Predicated region
        $region21: #{tpu_custom_call.1} parent=11 // pred_check
          %p516 = pneg %p422
        $region22: #{tpu_custom_call.1} parent=11 // pred_check_branch
          %518 = sbr.rel (%p516) target = $region24
        $region23: #{tpu_custom_call.1} parent=11 // pred_region
          _
        $region24: #{tpu_custom_call.1} parent=11 // pred_fallthru
          _
        // Predicated region
        $region25: #{tpu_custom_call.1} parent=11 // pred_check
          %p519 = pneg %p443
        $region26: #{tpu_custom_call.1} parent=11 // pred_check_branch
          %521 = sbr.rel (%p519) target = $region28
        $region27: #{tpu_custom_call.1} parent=11 // pred_region
          _
        $region28: #{tpu_custom_call.1} parent=11 // pred_fallthru
          _
      $region12: #{tpu_custom_call.1} parent=5 // pred_fallthru
        _
      %p522 = scmp.lt.s32.totalorder %s25, 2
      // Predicated region
      $region29: #{tpu_custom_call.1} parent=5 // pred_check
        %p523 = pneg %p522
      $region30: #{tpu_custom_call.1} parent=5 // pred_check_branch
        %525 = sbr.rel (%p523) target = $region32
      $region31: #{tpu_custom_call.1} parent=5 // pred_region
        // Predicated region
        $region33: #{tpu_custom_call.1} parent=31 // pred_check
          %p526 = pneg %p109
        $region34: #{tpu_custom_call.1} parent=31 // pred_check_branch
          %528 = sbr.rel (%p526) target = $region36
        $region35: #{tpu_custom_call.1} parent=31 // pred_region
          %p529 = scmp.lt.s32.totalorder %s33, 1
          %s530 = scalar_select %p529, %s33, 1
          %s531 = scalar_lea.vmem %s2, %s530
        $region36: #{tpu_custom_call.1} parent=31 // pred_fallthru
          _
        // Predicated region
        $region37: #{tpu_custom_call.1} parent=31 // pred_check
          %p532 = pneg %p135
        $region38: #{tpu_custom_call.1} parent=31 // pred_check_branch
          %534 = sbr.rel (%p532) target = $region40
        $region39: #{tpu_custom_call.1} parent=31 // pred_region
          %p535 = scmp.lt.s32.totalorder %s33, 1
          %s536 = scalar_select %p535, %s33, 1
          %s537 = scalar_lea.vmem %s3, %s536
        $region40: #{tpu_custom_call.1} parent=31 // pred_fallthru
          _
        // Predicated region
        $region41: #{tpu_custom_call.1} parent=31 // pred_check
          %p538 = pneg %p161
        $region42: #{tpu_custom_call.1} parent=31 // pred_check_branch
          %540 = sbr.rel (%p538) target = $region44
        $region43: #{tpu_custom_call.1} parent=31 // pred_region
          %p541 = scmp.lt.s32.totalorder %s33, 1
          %s542 = scalar_select %p541, %s33, 1
          %s543 = smul.addr %s542, 4
          %s544 = smul.addr %s543, 4
          %s545 = scalar_lea.vmem %s4, %s544
        $region44: #{tpu_custom_call.1} parent=31 // pred_fallthru
          _
        // Predicated region
        $region45: #{tpu_custom_call.1} parent=31 // pred_check
          %p546 = pneg %p187
        $region46: #{tpu_custom_call.1} parent=31 // pred_check_branch
          %548 = sbr.rel (%p546) target = $region48
        $region47: #{tpu_custom_call.1} parent=31 // pred_region
          %p549 = scmp.lt.s32.totalorder %s33, 1
          %s550 = scalar_select %p549, %s33, 1
          %s551 = scalar_lea.vmem %s5, %s550
        $region48: #{tpu_custom_call.1} parent=31 // pred_fallthru
          _
        // Predicated region
        $region49: #{tpu_custom_call.1} parent=31 // pred_check
          %p552 = pneg %p213
        $region50: #{tpu_custom_call.1} parent=31 // pred_check_branch
          %554 = sbr.rel (%p552) target = $region52
        $region51: #{tpu_custom_call.1} parent=31 // pred_region
          %p555 = scmp.lt.s32.totalorder %s33, 1
          %s556 = scalar_select %p555, %s33, 1
          %s557 = smul.addr %s556, 4
          %s558 = smul.addr %s557, 4
          %s559 = scalar_lea.vmem %s6, %s558
        $region52: #{tpu_custom_call.1} parent=31 // pred_fallthru
          _
        // Predicated region
        $region53: #{tpu_custom_call.1} parent=31 // pred_check
          %p560 = pneg %p239
        $region54: #{tpu_custom_call.1} parent=31 // pred_check_branch
          %562 = sbr.rel (%p560) target = $region56
        $region55: #{tpu_custom_call.1} parent=31 // pred_region
          %p563 = scmp.lt.s32.totalorder %s33, 1
          %s564 = scalar_select %p563, %s33, 1
          %s565 = scalar_lea.vmem %s7, %s564
        $region56: #{tpu_custom_call.1} parent=31 // pred_fallthru
          _
        // Predicated region
        $region57: #{tpu_custom_call.1} parent=31 // pred_check
          %p566 = pneg %p265
        $region58: #{tpu_custom_call.1} parent=31 // pred_check_branch
          %568 = sbr.rel (%p566) target = $region60
        $region59: #{tpu_custom_call.1} parent=31 // pred_region
          %p569 = scmp.lt.s32.totalorder %s33, 1
          %s570 = scalar_select %p569, %s33, 1
          %s571 = scalar_lea.vmem %s8, %s570
        $region60: #{tpu_custom_call.1} parent=31 // pred_fallthru
          _
        // Predicated region
        $region61: #{tpu_custom_call.1} parent=31 // pred_check
          %p572 = pneg %p291
        $region62: #{tpu_custom_call.1} parent=31 // pred_check_branch
          %574 = sbr.rel (%p572) target = $region64
        $region63: #{tpu_custom_call.1} parent=31 // pred_region
          %p575 = scmp.lt.s32.totalorder %s33, 1
          %s576 = scalar_select %p575, %s33, 1
          %s577 = scalar_lea.vmem %s9, %s576
        $region64: #{tpu_custom_call.1} parent=31 // pred_fallthru
          _
        // Predicated region
        $region65: #{tpu_custom_call.1} parent=31 // pred_check
          %p578 = pneg %p317
        $region66: #{tpu_custom_call.1} parent=31 // pred_check_branch
          %580 = sbr.rel (%p578) target = $region68
        $region67: #{tpu_custom_call.1} parent=31 // pred_region
          %p581 = scmp.lt.s32.totalorder %s33, 1
          %s582 = scalar_select %p581, %s33, 1
          %s583 = smul.addr %s582, 4
          %s584 = smul.addr %s583, 4
          %s585 = scalar_lea.vmem %s10, %s584
        $region68: #{tpu_custom_call.1} parent=31 // pred_fallthru
          _
        // Predicated region
        $region69: #{tpu_custom_call.1} parent=31 // pred_check
          %p586 = pneg %p343
        $region70: #{tpu_custom_call.1} parent=31 // pred_check_branch
          %588 = sbr.rel (%p586) target = $region72
        $region71: #{tpu_custom_call.1} parent=31 // pred_region
          %p589 = scmp.lt.s32.totalorder %s33, 1
          %s590 = scalar_select %p589, %s33, 1
          %s591 = scalar_lea.vmem %s11, %s590
        $region72: #{tpu_custom_call.1} parent=31 // pred_fallthru
          _
        // Predicated region
        $region73: #{tpu_custom_call.1} parent=31 // pred_check
          %p592 = pneg %p369
        $region74: #{tpu_custom_call.1} parent=31 // pred_check_branch
          %594 = sbr.rel (%p592) target = $region76
        $region75: #{tpu_custom_call.1} parent=31 // pred_region
          %p595 = scmp.lt.s32.totalorder %s33, 1
          %s596 = scalar_select %p595, %s33, 1
          %s597 = smul.addr %s596, 8
          %s598 = smul.addr %s597, 4
          %s599 = scalar_lea.vmem %s12, %s598
        $region76: #{tpu_custom_call.1} parent=31 // pred_fallthru
          _
        // Predicated region
        $region77: #{tpu_custom_call.1} parent=31 // pred_check
          %p600 = pneg %p395
        $region78: #{tpu_custom_call.1} parent=31 // pred_check_branch
          %602 = sbr.rel (%p600) target = $region80
        $region79: #{tpu_custom_call.1} parent=31 // pred_region
          %p603 = scmp.lt.s32.totalorder %s33, 1
          %s604 = scalar_select %p603, %s33, 1
          %s605 = scalar_lea.vmem %s13, %s604
        $region80: #{tpu_custom_call.1} parent=31 // pred_fallthru
          _
      $region32: #{tpu_custom_call.1} parent=5 // pred_fallthru
        _
      %p606 = scmp.le.s32.totalorder 1, %s25
      %p607 = scmp.lt.s32.totalorder %s25, 3
      %p608 = pnand %p606, %p607
      %p609 = pneg %p608
      // Predicated region
      $region81: #{tpu_custom_call.1} parent=5 // pred_check
        _
      $region82: #{tpu_custom_call.1} parent=5 // pred_check_branch
        %611 = sbr.rel (%p608) target = $region84
      $region83: #{tpu_custom_call.1} parent=5 // pred_region
        %s612 = ssub.s32 %s25, 1
        // Predicated region
        $region85: #{tpu_custom_call.1} parent=83 // pred_check
          %p613 = pneg %p63
        $region86: #{tpu_custom_call.1} parent=83 // pred_check_branch
          %615 = sbr.rel (%p613) target = $region88
        $region87: #{tpu_custom_call.1} parent=83 // pred_region
          %616 = dma.done [#allocation4], 256
        $region88: #{tpu_custom_call.1} parent=83 // pred_fallthru
          _
        // Predicated region
        $region89: #{tpu_custom_call.1} parent=83 // pred_check
          %p617 = pneg %p89
        $region90: #{tpu_custom_call.1} parent=83 // pred_check_branch
          %619 = sbr.rel (%p617) target = $region92
        $region91: #{tpu_custom_call.1} parent=83 // pred_region
          %620 = dma.done [#allocation7], 32
        $region92: #{tpu_custom_call.1} parent=83 // pred_fallthru
          _
        %p621 = pneg %p63
        %p622 = pneg %p60
        %p623 = pneg %p89
        %p624 = pneg %p86
        %p625 = scmp.lt.s32.totalorder %s35, 1
        %s626 = scalar_select %p625, %s35, 1
        %s627 = scalar_lea.vmem %s2, %s626
        %p628 = pneg %p115
        %p629 = pneg %p112
        %p630 = scmp.lt.s32.totalorder %s35, 1
        %s631 = scalar_select %p630, %s35, 1
        %s632 = scalar_lea.vmem %s3, %s631
        %p633 = pneg %p141
        %p634 = pneg %p138
        %p635 = scmp.lt.s32.totalorder %s35, 1
        %s636 = scalar_select %p635, %s35, 1
        %s637 = smul.addr %s636, 4
        %s638 = smul.addr %s637, 4
        %s639 = scalar_lea.vmem %s4, %s638
        %p640 = pneg %p167
        %p641 = pneg %p164
        %p642 = scmp.lt.s32.totalorder %s35, 1
        %s643 = scalar_select %p642, %s35, 1
        %s644 = scalar_lea.vmem %s5, %s643
        %p645 = pneg %p193
        %p646 = pneg %p190
        %p647 = scmp.lt.s32.totalorder %s35, 1
        %s648 = scalar_select %p647, %s35, 1
        %s649 = smul.addr %s648, 4
        %s650 = smul.addr %s649, 4
        %s651 = scalar_lea.vmem %s6, %s650
        %p652 = pneg %p219
        %p653 = pneg %p216
        %p654 = scmp.lt.s32.totalorder %s35, 1
        %s655 = scalar_select %p654, %s35, 1
        %s656 = scalar_lea.vmem %s7, %s655
        %p657 = pneg %p245
        %p658 = pneg %p242
        %p659 = scmp.lt.s32.totalorder %s35, 1
        %s660 = scalar_select %p659, %s35, 1
        %s661 = scalar_lea.vmem %s8, %s660
        %p662 = pneg %p271
        %p663 = pneg %p268
        %p664 = scmp.lt.s32.totalorder %s35, 1
        %s665 = scalar_select %p664, %s35, 1
        %s666 = scalar_lea.vmem %s9, %s665
        %p667 = pneg %p297
        %p668 = pneg %p294
        %p669 = scmp.lt.s32.totalorder %s35, 1
        %s670 = scalar_select %p669, %s35, 1
        %s671 = smul.addr %s670, 4
        %s672 = smul.addr %s671, 4
        %s673 = scalar_lea.vmem %s10, %s672
        %p674 = pneg %p323
        %p675 = pneg %p320
        %p676 = scmp.lt.s32.totalorder %s35, 1
        %s677 = scalar_select %p676, %s35, 1
        %s678 = scalar_lea.vmem %s11, %s677
        %p679 = pneg %p349
        %p680 = pneg %p346
        %p681 = scmp.lt.s32.totalorder %s35, 1
        %s682 = scalar_select %p681, %s35, 1
        %s683 = smul.addr %s682, 8
        %s684 = smul.addr %s683, 4
        %s685 = scalar_lea.vmem %s12, %s684
        %p686 = pneg %p375
        %p687 = pneg %p372
        %p688 = scmp.lt.s32.totalorder %s35, 1
        %s689 = scalar_select %p688, %s35, 1
        %s690 = scalar_lea.vmem %s13, %s689
        %p691 = pneg %p401
        %p692 = pneg %p398
        %p693 = pneg %p422
        %p694 = pneg %p419
        %p695 = pneg %p443
        %p696 = pneg %p440
        %p697 = pneg %p469
        %p698 = pneg %p466
        %s699 = smul.u32 2, %s34
        %s700 = smul.u32 2, %s34
        %p701 = scmp.lt.s32.totalorder %s35, 1
        %s702 = scalar_select %p701, %s35, 1
        %s703 = scalar_lea.vmem %s2, %s702
        %p704 = scmp.lt.s32.totalorder %s35, 1
        %s705 = scalar_select %p704, %s35, 1
        %s706 = scalar_lea.vmem %s3, %s705
        %p707 = scmp.lt.s32.totalorder %s35, 1
        %s708 = scalar_select %p707, %s35, 1
        %s709 = smul.addr %s708, 4
        %s710 = smul.addr %s709, 4
        %s711 = scalar_lea.vmem %s4, %s710
        %p712 = scmp.lt.s32.totalorder %s35, 1
        %s713 = scalar_select %p712, %s35, 1
        %s714 = scalar_lea.vmem %s5, %s713
        %p715 = scmp.lt.s32.totalorder %s35, 1
        %s716 = scalar_select %p715, %s35, 1
        %s717 = smul.addr %s716, 4
        %s718 = smul.addr %s717, 4
        %s719 = scalar_lea.vmem %s6, %s718
        %p720 = scmp.lt.s32.totalorder %s35, 1
        %s721 = scalar_select %p720, %s35, 1
        %s722 = scalar_lea.vmem %s7, %s721
        %p723 = scmp.lt.s32.totalorder %s35, 1
        %s724 = scalar_select %p723, %s35, 1
        %s725 = scalar_lea.vmem %s8, %s724
        %p726 = scmp.lt.s32.totalorder %s35, 1
        %s727 = scalar_select %p726, %s35, 1
        %s728 = scalar_lea.vmem %s9, %s727
        %p729 = scmp.lt.s32.totalorder %s35, 1
        %s730 = scalar_select %p729, %s35, 1
        %s731 = smul.addr %s730, 4
        %s732 = smul.addr %s731, 4
        %s733 = scalar_lea.vmem %s10, %s732
        %p734 = scmp.lt.s32.totalorder %s35, 1
        %s735 = scalar_select %p734, %s35, 1
        %s736 = scalar_lea.vmem %s11, %s735
        %p737 = scmp.lt.s32.totalorder %s35, 1
        %s738 = scalar_select %p737, %s35, 1
        %s739 = smul.addr %s738, 8
        %s740 = smul.addr %s739, 4
        %s741 = scalar_lea.vmem %s12, %s740
        %p742 = scmp.lt.s32.totalorder %s35, 1
        %s743 = scalar_select %p742, %s35, 1
        %s744 = scalar_lea.vmem %s13, %s743
        %s745 = smul.u32 2, %s34
        %p747 = scmp.eq.s32.totalorder %s35, 0
        // Predicated region
        $region93: #{tpu_custom_call.1} parent=83 // pred_check
          %p748 = pneg %p747
        $region94: #{tpu_custom_call.1} parent=83 // pred_check_branch
          %750 = sbr.rel (%p748) target = $region96
        $region95: #{tpu_custom_call.1} parent=83 // pred_region
          %v751 = vld [vmem:[#allocation3] sm:$0xff]
          %v752 = vld [vmem:[#allocation3 + $0x8] sm:$0xff]
          %vm753 = vcmask 261120
          %754 = vst.msk [vmem:[#allocation2] sm:$0xff] %vm753, %v751
          %755 = vst.msk [vmem:[#allocation2 + $0x8] sm:$0xff] %vm753, %v752
        $region96: #{tpu_custom_call.1} parent=83 // pred_fallthru
          _
        %v756 = vld [vmem:[#allocation2] sm:$0xff]
        %v757 = vld [vmem:[#allocation2 + $0x8] sm:$0xff]
        %v758 = vld [vmem:[#allocation6] sm:$0x1]
        %v759 = vld [vmem:[#allocation6 + $0x1] sm:$0x1]
        %v760 = vsub.f32 %v758, 1.0
        %v761 = vsub.f32 %v759, 1.0
        %v762 = vmul.f32 %v760, 1e+30
        %v763 = vmul.f32 %v761, 1e+30
        %v764 = vld [vmem:[%s703] sm:$0x1]
        %v765 = vld [vmem:[%s706] sm:$0x1]
        %vm766 = vcmask 261120
        %v767 = vsel %vm766, %v756, 0.0
        %768 = vadd.xlane.f32.xlu0 %v767
        %v769 = vpop.xlane.xlu0 %768
        %v770 = vsel %vm766, %v757, 0.0
        %771 = vadd.xlane.f32.xlu0 %v770
        %v772 = vpop.xlane.xlu0 %771
        %v773 = vrcp.pop 32.0
        %v774 = vmul.f32 %v769, %v773
        %v775 = vmul.f32 %v772, %v773
        %v776 = vsub.f32 %v756, %v774
        %v777 = vsub.f32 %v757, %v775
        %v778 = vmul.f32 %v776, %v776
        %v779 = vmul.f32 %v777, %v777
        %v780 = vsel %vm766, %v778, 0.0
        %781 = vadd.xlane.f32.xlu0 %v780
        %v782 = vpop.xlane.xlu0 %781
        %v783 = vsel %vm766, %v779, 0.0
        %784 = vadd.xlane.f32.xlu0 %v783
        %v785 = vpop.xlane.xlu0 %784
        %v786 = vmul.f32 %v782, %v773
        %v787 = vmul.f32 %v785, %v773
        %v788 = vadd.f32 %v786, 1e-05
        %v789 = vadd.f32 %v787, 1e-05
        %v790 = vrsqrt.pop %v788
        %v791 = vrsqrt.pop %v789
        %v792 = vmul.f32 %v776, %v790
        %v793 = vmul.f32 %v777, %v791
        %v795 = vlaneseq
        %v796 = vshrl.u32 %v795, 7
        %v797 = vsub.s32 0, %v796
        %v798 = vrot.slane %v764, %v797
        %v800 = vmul.f32 %v792, %v798
        %v801 = vmul.f32 %v793, %v798
        %v803 = vlaneseq
        %v804 = vshrl.u32 %v803, 7
        %v805 = vsub.s32 0, %v804
        %v806 = vrot.slane %v765, %v805
        %v808 = vadd.f32 %v800, %v806
        %v809 = vadd.f32 %v801, %v806
        %v810 = vpack.c.bf16 %v809, %v808
        %v811 = vld [vmem:[%s711] sm:$0xf]
        %v812 = vld [vmem:[%s711 + $0x4] sm:$0xf]
        %v813 = vld [vmem:[%s711 + $0x8] sm:$0xf]
        %v814 = vld [vmem:[%s711 + $0xc] sm:$0xf]
        %v815 = vld [vmem:[%s714] sm:$0x1]
        %v817 = vlaneseq
        %v818 = vshrl.u32 %v817, 7
        %v819 = vsub.s32 0, %v818
        %v820 = vrot.slane %v815, %v819
        %v826 = vunpack.c.l.b16 %v811
        %v827 = vunpack.c.l.b16 %v812
        %v828 = vunpack.c.l.b16 %v813
        %v829 = vunpack.c.l.b16 %v814
        %v830 = vpack.c.b16 %v827, %v826
        %v831 = vpack.c.b16 %v829, %v828
        %v835 = vsel %vm766, %v810, 0
        %837 = vmatprep.subr.bf16.mxu0 0
        %838 = vmatpush1.bf16.msra.mxu0 0
        %839 = vmatprep.subr.bf16.mxu0 0
        %840 = vmatpush1.bf16.msra.mxu0 0
        %841 = vmatprep.subr.bf16.mxu0 0
        %842 = vmatpush1.bf16.msra.mxu0 0
        %843 = vmatprep.subr.bf16.mxu0 0
        %844 = vmatpush1.bf16.msra.mxu0 0
        %845 = vmatprep.subr.bf16.mxu0 0
        %846 = vmatpush1.bf16.msra.mxu0 0
        %847 = vmatprep.subr.bf16.mxu0 0
        %848 = vmatpush1.bf16.msra.mxu0 0
        %849 = vmatprep.subr.bf16.mxu0 0
        %850 = vmatpush1.bf16.msra.mxu0 %v831
        %851 = vmatprep.subr.bf16.mxu0 0
        %852 = vmatpush1.bf16.msra.mxu0 %v830
        %853 = vmatprep.subr.bf16.mxu0 0
        %854 = vmatpush2.bf16.msra.mxu0 0
        %855 = vmatprep.subr.bf16.mxu0 0
        %856 = vmatpush2.bf16.msra.mxu0 0
        %857 = vmatprep.subr.bf16.mxu0 0
        %858 = vmatpush2.bf16.msra.mxu0 0
        %859 = vmatprep.subr.bf16.mxu0 0
        %860 = vmatpush2.bf16.msra.mxu0 0
        %861 = vmatprep.subr.bf16.mxu0 0
        %862 = vmatpush2.bf16.msra.mxu0 0
        %863 = vmatprep.subr.bf16.mxu0 0
        %864 = vmatpush2.bf16.msra.mxu0 0
        %865 = vmatprep.subr.bf16.mxu0 0
        %866 = vmatpush2.bf16.msra.mxu0 0
        %867 = vmatprep.subr.bf16.mxu0 0
        %868 = vmatpush2.bf16.msra.mxu0 0
        %869 = vmatprep.mubr.bf16.mxu0 0
        %870 = vmatmul.mubr.bf16.gmra.mxu0 %v835
        %v871 = vpop.f32.mrf.mxu0
        %v872 = vadd.f32 %v820, %v871
        %v873 = vpop.f32.mrf.mxu0
        %v874 = vpop.f32.mrf.mxu0
        %v875 = vadd.f32 %v820, %v874
        %v876 = vpop.f32.mrf.mxu0
        %877 = vdwg.mxu0
        %v878 = vmul.f32 %v872, 0.35355338
        %v879 = vmul.f32 %v875, 0.35355338
        %v880 = vpack.c.bf16 %v878, %v878
        %v881 = vpack.c.bf16 %v879, %v879
        %884 = vrot.lane.b32.xlu0 %v880, 120
        %v885 = vpop.permute.xlu0 %884
        %886 = vrot.lane.b32.xlu0 %v881, 120
        %v887 = vpop.permute.xlu0 %886
        %888 = vrot.lane.b32.xlu0 %v880, 112
        %v889 = vpop.permute.xlu0 %888
        %890 = vrot.lane.b32.xlu0 %v881, 112
        %v891 = vpop.permute.xlu0 %890
        %892 = vrot.lane.b32.xlu0 %v880, 104
        %v893 = vpop.permute.xlu0 %892
        %894 = vrot.lane.b32.xlu0 %v881, 104
        %v895 = vpop.permute.xlu0 %894
        %v896 = vpack.c.bf16 %v872, %v872
        %v897 = vpack.c.bf16 %v875, %v875
        %900 = vrot.lane.b32.xlu0 %v896, 120
        %v901 = vpop.permute.xlu0 %900
        %902 = vrot.lane.b32.xlu0 %v897, 120
        %v903 = vpop.permute.xlu0 %902
        %904 = vrot.lane.b32.xlu0 %v896, 112
        %v905 = vpop.permute.xlu0 %904
        %906 = vrot.lane.b32.xlu0 %v897, 112
        %v907 = vpop.permute.xlu0 %906
        %908 = vrot.lane.b32.xlu0 %v896, 104
        %v909 = vpop.permute.xlu0 %908
        %910 = vrot.lane.b32.xlu0 %v897, 104
        %v911 = vpop.permute.xlu0 %910
        %v914 = vlaneseq
        %v915 = vshrl.u32 %v914, 7
        %v916 = vsub.s32 0, %v915
        %v917 = vrot.slane %v762, %v916
        %v918 = vlaneseq
        %v919 = vshrl.u32 %v918, 7
        %v920 = vsub.s32 0, %v919
        %v921 = vrot.slane %v763, %v920
        %924 = vrot.lane.b32.xlu0 %v896, 96
        %v925 = vpop.permute.xlu0 %924
        %vm926 = vcmask 64512
        %v928 = vsel %vm926, %v880, 0
        %v931 = vsel %vm926, %v925, 0
        %933 = vmatprep.subr.bf16.mxu0 0
        %934 = vmatpush1.bf16.xpose.msra.mxu0 0
        %935 = vmatprep.subr.bf16.mxu0 0
        %936 = vmatpush1.bf16.xpose.msra.mxu0 0
        %937 = vmatprep.subr.bf16.mxu0 0
        %938 = vmatpush1.bf16.xpose.msra.mxu0 0
        %939 = vmatprep.subr.bf16.mxu0 0
        %940 = vmatpush1.bf16.xpose.msra.mxu0 0
        %941 = vmatprep.subr.bf16.mxu0 0
        %942 = vmatpush1.bf16.xpose.msra.mxu0 0
        %943 = vmatprep.subr.bf16.mxu0 0
        %944 = vmatpush1.bf16.xpose.msra.mxu0 0
        %945 = vmatprep.subr.bf16.mxu0 0
        %946 = vmatpush1.bf16.xpose.msra.mxu0 0
        %947 = vmatprep.subr.bf16.mxu0 0
        %948 = vmatpush1.bf16.xpose.msra.mxu0 %v931
        %949 = vmatprep.subr.bf16.mxu0 0
        %950 = vmatpush2.bf16.xpose.msra.mxu0 0
        %951 = vmatprep.subr.bf16.mxu0 0
        %952 = vmatpush2.bf16.xpose.msra.mxu0 0
        %953 = vmatprep.subr.bf16.mxu0 0
        %954 = vmatpush2.bf16.xpose.msra.mxu0 0
        %955 = vmatprep.subr.bf16.mxu0 0
        %956 = vmatpush2.bf16.xpose.msra.mxu0 0
        %957 = vmatprep.subr.bf16.mxu0 0
        %958 = vmatpush2.bf16.xpose.msra.mxu0 0
        %959 = vmatprep.subr.bf16.mxu0 0
        %960 = vmatpush2.bf16.xpose.msra.mxu0 0
        %961 = vmatprep.subr.bf16.mxu0 0
        %962 = vmatpush2.bf16.xpose.msra.mxu0 0
        %963 = vmatprep.subr.bf16.mxu0 0
        %964 = vmatpush2.bf16.xpose.msra.mxu0 0
        %965 = vmatprep.mubr.bf16.mxu0 0
        %966 = vmatmul.mubr.bf16.gmra.mxu0 %v928
        %v967 = vpop.f32.mrf.mxu0
        %v968 = vadd.f32 %v917, %v967
        %v969 = vpop.f32.mrf.mxu0
        %v970 = vpop.f32.mrf.mxu0
        %v971 = vpop.f32.mrf.mxu0
        %972 = vdwg.mxu0
        %973 = vrot.lane.b32.xlu0 %v897, 96
        %v974 = vpop.permute.xlu0 %973
        %v976 = vsel %vm926, %v881, 0
        %v979 = vsel %vm926, %v974, 0
        %981 = vmatprep.subr.bf16.mxu0 0
        %982 = vmatpush1.bf16.xpose.msra.mxu0 0
        %983 = vmatprep.subr.bf16.mxu0 0
        %984 = vmatpush1.bf16.xpose.msra.mxu0 0
        %985 = vmatprep.subr.bf16.mxu0 0
        %986 = vmatpush1.bf16.xpose.msra.mxu0 0
        %987 = vmatprep.subr.bf16.mxu0 0
        %988 = vmatpush1.bf16.xpose.msra.mxu0 0
        %989 = vmatprep.subr.bf16.mxu0 0
        %990 = vmatpush1.bf16.xpose.msra.mxu0 0
        %991 = vmatprep.subr.bf16.mxu0 0
        %992 = vmatpush1.bf16.xpose.msra.mxu0 0
        %993 = vmatprep.subr.bf16.mxu0 0
        %994 = vmatpush1.bf16.xpose.msra.mxu0 0
        %995 = vmatprep.subr.bf16.mxu0 0
        %996 = vmatpush1.bf16.xpose.msra.mxu0 %v979
        %997 = vmatprep.subr.bf16.mxu0 0
        %998 = vmatpush2.bf16.xpose.msra.mxu0 0
        %999 = vmatprep.subr.bf16.mxu0 0
        %1000 = vmatpush2.bf16.xpose.msra.mxu0 0
        %1001 = vmatprep.subr.bf16.mxu0 0
        %1002 = vmatpush2.bf16.xpose.msra.mxu0 0
        %1003 = vmatprep.subr.bf16.mxu0 0
        %1004 = vmatpush2.bf16.xpose.msra.mxu0 0
        %1005 = vmatprep.subr.bf16.mxu0 0
        %1006 = vmatpush2.bf16.xpose.msra.mxu0 0
        %1007 = vmatprep.subr.bf16.mxu0 0
        %1008 = vmatpush2.bf16.xpose.msra.mxu0 0
        %1009 = vmatprep.subr.bf16.mxu0 0
        %1010 = vmatpush2.bf16.xpose.msra.mxu0 0
        %1011 = vmatprep.subr.bf16.mxu0 0
        %1012 = vmatpush2.bf16.xpose.msra.mxu0 0
        %1013 = vmatprep.mubr.bf16.mxu0 0
        %1014 = vmatmul.mubr.bf16.gmra.mxu0 %v976
        %v1015 = vpop.f32.mrf.mxu0
        %v1016 = vadd.f32 %v921, %v1015
        %v1017 = vpop.f32.mrf.mxu0
        %v1018 = vpop.f32.mrf.mxu0
        %v1019 = vpop.f32.mrf.mxu0
        %1020 = vdwg.mxu0
        %1021 = vrot.lane.b32.xlu0 %v901, 96
        %v1022 = vpop.permute.xlu0 %1021
        %v1024 = vsel %vm926, %v885, 0
        %v1027 = vsel %vm926, %v1022, 0
        %1029 = vmatprep.subr.bf16.mxu0 0
        %1030 = vmatpush1.bf16.xpose.msra.mxu0 0
        %1031 = vmatprep.subr.bf16.mxu0 0
        %1032 = vmatpush1.bf16.xpose.msra.mxu0 0
        %1033 = vmatprep.subr.bf16.mxu0 0
        %1034 = vmatpush1.bf16.xpose.msra.mxu0 0
        %1035 = vmatprep.subr.bf16.mxu0 0
        %1036 = vmatpush1.bf16.xpose.msra.mxu0 0
        %1037 = vmatprep.subr.bf16.mxu0 0
        %1038 = vmatpush1.bf16.xpose.msra.mxu0 0
        %1039 = vmatprep.subr.bf16.mxu0 0
        %1040 = vmatpush1.bf16.xpose.msra.mxu0 0
        %1041 = vmatprep.subr.bf16.mxu0 0
        %1042 = vmatpush1.bf16.xpose.msra.mxu0 0
        %1043 = vmatprep.subr.bf16.mxu0 0
        %1044 = vmatpush1.bf16.xpose.msra.mxu0 %v1027
        %1045 = vmatprep.subr.bf16.mxu0 0
        %1046 = vmatpush2.bf16.xpose.msra.mxu0 0
        %1047 = vmatprep.subr.bf16.mxu0 0
        %1048 = vmatpush2.bf16.xpose.msra.mxu0 0
        %1049 = vmatprep.subr.bf16.mxu0 0
        %1050 = vmatpush2.bf16.xpose.msra.mxu0 0
        %1051 = vmatprep.subr.bf16.mxu0 0
        %1052 = vmatpush2.bf16.xpose.msra.mxu0 0
        %1053 = vmatprep.subr.bf16.mxu0 0
        %1054 = vmatpush2.bf16.xpose.msra.mxu0 0
        %1055 = vmatprep.subr.bf16.mxu0 0
        %1056 = vmatpush2.bf16.xpose.msra.mxu0 0
        %1057 = vmatprep.subr.bf16.mxu0 0
        %1058 = vmatpush2.bf16.xpose.msra.mxu0 0
        %1059 = vmatprep.subr.bf16.mxu0 0
        %1060 = vmatpush2.bf16.xpose.msra.mxu0 0
        %1061 = vmatprep.mubr.bf16.mxu0 0
        %1062 = vmatmul.mubr.bf16.gmra.mxu0 %v1024
        %v1063 = vpop.f32.mrf.mxu0
        %v1064 = vadd.f32 %v917, %v1063
        %v1065 = vpop.f32.mrf.mxu0
        %v1066 = vpop.f32.mrf.mxu0
        %v1067 = vpop.f32.mrf.mxu0
        %1068 = vdwg.mxu0
        %1069 = vrot.lane.b32.xlu0 %v903, 96
        %v1070 = vpop.permute.xlu0 %1069
        %v1072 = vsel %vm926, %v887, 0
        %v1075 = vsel %vm926, %v1070, 0
        %1077 = vmatprep.subr.bf16.mxu0 0
        %1078 = vmatpush1.bf16.xpose.msra.mxu0 0
        %1079 = vmatprep.subr.bf16.mxu0 0
        %1080 = vmatpush1.bf16.xpose.msra.mxu0 0
        %1081 = vmatprep.subr.bf16.mxu0 0
        %1082 = vmatpush1.bf16.xpose.msra.mxu0 0
        %1083 = vmatprep.subr.bf16.mxu0 0
        %1084 = vmatpush1.bf16.xpose.msra.mxu0 0
        %1085 = vmatprep.subr.bf16.mxu0 0
        %1086 = vmatpush1.bf16.xpose.msra.mxu0 0
        %1087 = vmatprep.subr.bf16.mxu0 0
        %1088 = vmatpush1.bf16.xpose.msra.mxu0 0
        %1089 = vmatprep.subr.bf16.mxu0 0
        %1090 = vmatpush1.bf16.xpose.msra.mxu0 0
        %1091 = vmatprep.subr.bf16.mxu0 0
        %1092 = vmatpush1.bf16.xpose.msra.mxu0 %v1075
        %1093 = vmatprep.subr.bf16.mxu0 0
        %1094 = vmatpush2.bf16.xpose.msra.mxu0 0
        %1095 = vmatprep.subr.bf16.mxu0 0
        %1096 = vmatpush2.bf16.xpose.msra.mxu0 0
        %1097 = vmatprep.subr.bf16.mxu0 0
        %1098 = vmatpush2.bf16.xpose.msra.mxu0 0
        %1099 = vmatprep.subr.bf16.mxu0 0
        %1100 = vmatpush2.bf16.xpose.msra.mxu0 0
        %1101 = vmatprep.subr.bf16.mxu0 0
        %1102 = vmatpush2.bf16.xpose.msra.mxu0 0
        %1103 = vmatprep.subr.bf16.mxu0 0
        %1104 = vmatpush2.bf16.xpose.msra.mxu0 0
        %1105 = vmatprep.subr.bf16.mxu0 0
        %1106 = vmatpush2.bf16.xpose.msra.mxu0 0
        %1107 = vmatprep.subr.bf16.mxu0 0
        %1108 = vmatpush2.bf16.xpose.msra.mxu0 0
        %1109 = vmatprep.mubr.bf16.mxu0 0
        %1110 = vmatmul.mubr.bf16.gmra.mxu0 %v1072
        %v1111 = vpop.f32.mrf.mxu0
        %v1112 = vadd.f32 %v921, %v1111
        %v1113 = vpop.f32.mrf.mxu0
        %v1114 = vpop.f32.mrf.mxu0
        %v1115 = vpop.f32.mrf.mxu0
        %1116 = vdwg.mxu0
        %1117 = vrot.lane.b32.xlu0 %v905, 96
        %v1118 = vpop.permute.xlu0 %1117
        %v1120 = vsel %vm926, %v889, 0
        %v1123 = vsel %vm926, %v1118, 0
        %1125 = vmatprep.subr.bf16.mxu0 0
        %1126 = vmatpush1.bf16.xpose.msra.mxu0 0
        %1127 = vmatprep.subr.bf16.mxu0 0
        %1128 = vmatpush1.bf16.xpose.msra.mxu0 0
        %1129 = vmatprep.subr.bf16.mxu0 0
        %1130 = vmatpush1.bf16.xpose.msra.mxu0 0
        %1131 = vmatprep.subr.bf16.mxu0 0
        %1132 = vmatpush1.bf16.xpose.msra.mxu0 0
        %1133 = vmatprep.subr.bf16.mxu0 0
        %1134 = vmatpush1.bf16.xpose.msra.mxu0 0
        %1135 = vmatprep.subr.bf16.mxu0 0
        %1136 = vmatpush1.bf16.xpose.msra.mxu0 0
        %1137 = vmatprep.subr.bf16.mxu0 0
        %1138 = vmatpush1.bf16.xpose.msra.mxu0 0
        %1139 = vmatprep.subr.bf16.mxu0 0
        %1140 = vmatpush1.bf16.xpose.msra.mxu0 %v1123
        %1141 = vmatprep.subr.bf16.mxu0 0
        %1142 = vmatpush2.bf16.xpose.msra.mxu0 0
        %1143 = vmatprep.subr.bf16.mxu0 0
        %1144 = vmatpush2.bf16.xpose.msra.mxu0 0
        %1145 = vmatprep.subr.bf16.mxu0 0
        %1146 = vmatpush2.bf16.xpose.msra.mxu0 0
        %1147 = vmatprep.subr.bf16.mxu0 0
        %1148 = vmatpush2.bf16.xpose.msra.mxu0 0
        %1149 = vmatprep.subr.bf16.mxu0 0
        %1150 = vmatpush2.bf16.xpose.msra.mxu0 0
        %1151 = vmatprep.subr.bf16.mxu0 0
        %1152 = vmatpush2.bf16.xpose.msra.mxu0 0
        %1153 = vmatprep.subr.bf16.mxu0 0
        %1154 = vmatpush2.bf16.xpose.msra.mxu0 0
        %1155 = vmatprep.subr.bf16.mxu0 0
        %1156 = vmatpush2.bf16.xpose.msra.mxu0 0
        %1157 = vmatprep.mubr.bf16.mxu0 0
        %1158 = vmatmul.mubr.bf16.gmra.mxu0 %v1120
        %v1159 = vpop.f32.mrf.mxu0
        %v1160 = vadd.f32 %v917, %v1159
        %v1161 = vpop.f32.mrf.mxu0
        %v1162 = vpop.f32.mrf.mxu0
        %v1163 = vpop.f32.mrf.mxu0
        %1164 = vdwg.mxu0
        %1165 = vrot.lane.b32.xlu0 %v907, 96
        %v1166 = vpop.permute.xlu0 %1165
        %v1168 = vsel %vm926, %v891, 0
        %v1171 = vsel %vm926, %v1166, 0
        %1173 = vmatprep.subr.bf16.mxu0 0
        %1174 = vmatpush1.bf16.xpose.msra.mxu0 0
        %1175 = vmatprep.subr.bf16.mxu0 0
        %1176 = vmatpush1.bf16.xpose.msra.mxu0 0
        %1177 = vmatprep.subr.bf16.mxu0 0
        %1178 = vmatpush1.bf16.xpose.msra.mxu0 0
        %1179 = vmatprep.subr.bf16.mxu0 0
        %1180 = vmatpush1.bf16.xpose.msra.mxu0 0
        %1181 = vmatprep.subr.bf16.mxu0 0
        %1182 = vmatpush1.bf16.xpose.msra.mxu0 0
        %1183 = vmatprep.subr.bf16.mxu0 0
        %1184 = vmatpush1.bf16.xpose.msra.mxu0 0
        %1185 = vmatprep.subr.bf16.mxu0 0
        %1186 = vmatpush1.bf16.xpose.msra.mxu0 0
        %1187 = vmatprep.subr.bf16.mxu0 0
        %1188 = vmatpush1.bf16.xpose.msra.mxu0 %v1171
        %1189 = vmatprep.subr.bf16.mxu0 0
        %1190 = vmatpush2.bf16.xpose.msra.mxu0 0
        %1191 = vmatprep.subr.bf16.mxu0 0
        %1192 = vmatpush2.bf16.xpose.msra.mxu0 0
        %1193 = vmatprep.subr.bf16.mxu0 0
        %1194 = vmatpush2.bf16.xpose.msra.mxu0 0
        %1195 = vmatprep.subr.bf16.mxu0 0
        %1196 = vmatpush2.bf16.xpose.msra.mxu0 0
        %1197 = vmatprep.subr.bf16.mxu0 0
        %1198 = vmatpush2.bf16.xpose.msra.mxu0 0
        %1199 = vmatprep.subr.bf16.mxu0 0
        %1200 = vmatpush2.bf16.xpose.msra.mxu0 0
        %1201 = vmatprep.subr.bf16.mxu0 0
        %1202 = vmatpush2.bf16.xpose.msra.mxu0 0
        %1203 = vmatprep.subr.bf16.mxu0 0
        %1204 = vmatpush2.bf16.xpose.msra.mxu0 0
        %1205 = vmatprep.mubr.bf16.mxu0 0
        %1206 = vmatmul.mubr.bf16.gmra.mxu0 %v1168
        %v1207 = vpop.f32.mrf.mxu0
        %v1208 = vadd.f32 %v921, %v1207
        %v1209 = vpop.f32.mrf.mxu0
        %v1210 = vpop.f32.mrf.mxu0
        %v1211 = vpop.f32.mrf.mxu0
        %1212 = vdwg.mxu0
        %1213 = vrot.lane.b32.xlu0 %v909, 96
        %v1214 = vpop.permute.xlu0 %1213
        %v1216 = vsel %vm926, %v893, 0
        %v1219 = vsel %vm926, %v1214, 0
        %1221 = vmatprep.subr.bf16.mxu0 0
        %1222 = vmatpush1.bf16.xpose.msra.mxu0 0
        %1223 = vmatprep.subr.bf16.mxu0 0
        %1224 = vmatpush1.bf16.xpose.msra.mxu0 0
        %1225 = vmatprep.subr.bf16.mxu0 0
        %1226 = vmatpush1.bf16.xpose.msra.mxu0 0
        %1227 = vmatprep.subr.bf16.mxu0 0
        %1228 = vmatpush1.bf16.xpose.msra.mxu0 0
        %1229 = vmatprep.subr.bf16.mxu0 0
        %1230 = vmatpush1.bf16.xpose.msra.mxu0 0
        %1231 = vmatprep.subr.bf16.mxu0 0
        %1232 = vmatpush1.bf16.xpose.msra.mxu0 0
        %1233 = vmatprep.subr.bf16.mxu0 0
        %1234 = vmatpush1.bf16.xpose.msra.mxu0 0
        %1235 = vmatprep.subr.bf16.mxu0 0
        %1236 = vmatpush1.bf16.xpose.msra.mxu0 %v1219
        %1237 = vmatprep.subr.bf16.mxu0 0
        %1238 = vmatpush2.bf16.xpose.msra.mxu0 0
        %1239 = vmatprep.subr.bf16.mxu0 0
        %1240 = vmatpush2.bf16.xpose.msra.mxu0 0
        %1241 = vmatprep.subr.bf16.mxu0 0
        %1242 = vmatpush2.bf16.xpose.msra.mxu0 0
        %1243 = vmatprep.subr.bf16.mxu0 0
        %1244 = vmatpush2.bf16.xpose.msra.mxu0 0
        %1245 = vmatprep.subr.bf16.mxu0 0
        %1246 = vmatpush2.bf16.xpose.msra.mxu0 0
        %1247 = vmatprep.subr.bf16.mxu0 0
        %1248 = vmatpush2.bf16.xpose.msra.mxu0 0
        %1249 = vmatprep.subr.bf16.mxu0 0
        %1250 = vmatpush2.bf16.xpose.msra.mxu0 0
        %1251 = vmatprep.subr.bf16.mxu0 0
        %1252 = vmatpush2.bf16.xpose.msra.mxu0 0
        %1253 = vmatprep.mubr.bf16.mxu0 0
        %1254 = vmatmul.mubr.bf16.gmra.mxu0 %v1216
        %v1255 = vpop.f32.mrf.mxu0
        %v1256 = vadd.f32 %v917, %v1255
        %v1257 = vpop.f32.mrf.mxu0
        %v1258 = vpop.f32.mrf.mxu0
        %v1259 = vpop.f32.mrf.mxu0
        %1260 = vdwg.mxu0
        %1261 = vrot.lane.b32.xlu0 %v911, 96
        %v1262 = vpop.permute.xlu0 %1261
        %v1264 = vsel %vm926, %v895, 0
        %v1267 = vsel %vm926, %v1262, 0
        %1269 = vmatprep.subr.bf16.mxu0 0
        %1270 = vmatpush1.bf16.xpose.msra.mxu0 0
        %1271 = vmatprep.subr.bf16.mxu0 0
        %1272 = vmatpush1.bf16.xpose.msra.mxu0 0
        %1273 = vmatprep.subr.bf16.mxu0 0
        %1274 = vmatpush1.bf16.xpose.msra.mxu0 0
        %1275 = vmatprep.subr.bf16.mxu0 0
        %1276 = vmatpush1.bf16.xpose.msra.mxu0 0
        %1277 = vmatprep.subr.bf16.mxu0 0
        %1278 = vmatpush1.bf16.xpose.msra.mxu0 0
        %1279 = vmatprep.subr.bf16.mxu0 0
        %1280 = vmatpush1.bf16.xpose.msra.mxu0 0
        %1281 = vmatprep.subr.bf16.mxu0 0
        %1282 = vmatpush1.bf16.xpose.msra.mxu0 0
        %1283 = vmatprep.subr.bf16.mxu0 0
        %1284 = vmatpush1.bf16.xpose.msra.mxu0 %v1267
        %1285 = vmatprep.subr.bf16.mxu0 0
        %1286 = vmatpush2.bf16.xpose.msra.mxu0 0
        %1287 = vmatprep.subr.bf16.mxu0 0
        %1288 = vmatpush2.bf16.xpose.msra.mxu0 0
        %1289 = vmatprep.subr.bf16.mxu0 0
        %1290 = vmatpush2.bf16.xpose.msra.mxu0 0
        %1291 = vmatprep.subr.bf16.mxu0 0
        %1292 = vmatpush2.bf16.xpose.msra.mxu0 0
        %1293 = vmatprep.subr.bf16.mxu0 0
        %1294 = vmatpush2.bf16.xpose.msra.mxu0 0
        %1295 = vmatprep.subr.bf16.mxu0 0
        %1296 = vmatpush2.bf16.xpose.msra.mxu0 0
        %1297 = vmatprep.subr.bf16.mxu0 0
        %1298 = vmatpush2.bf16.xpose.msra.mxu0 0
        %1299 = vmatprep.subr.bf16.mxu0 0
        %1300 = vmatpush2.bf16.xpose.msra.mxu0 0
        %1301 = vmatprep.mubr.bf16.mxu0 0
        %1302 = vmatmul.mubr.bf16.gmra.mxu0 %v1264
        %v1303 = vpop.f32.mrf.mxu0
        %v1304 = vadd.f32 %v921, %v1303
        %v1305 = vpop.f32.mrf.mxu0
        %v1306 = vpop.f32.mrf.mxu0
        %v1307 = vpop.f32.mrf.mxu0
        %1308 = vdwg.mxu0
        %v1309 = vsel %vm926, %v968, -inf
        %1310 = vmax.xlane.f32.xlu0 %v1309
        %v1311 = vpop.xlane.xlu0 %1310
        %v1312 = vsel %vm926, %v1016, -inf
        %1313 = vmax.xlane.f32.xlu0 %v1312
        %v1314 = vpop.xlane.xlu0 %1313
        %v1315 = vsel %vm926, %v1064, -inf
        %1316 = vmax.xlane.f32.xlu0 %v1315
        %v1317 = vpop.xlane.xlu0 %1316
        %v1318 = vsel %vm926, %v1112, -inf
        %1319 = vmax.xlane.f32.xlu0 %v1318
        %v1320 = vpop.xlane.xlu0 %1319
        %v1321 = vsel %vm926, %v1160, -inf
        %1322 = vmax.xlane.f32.xlu0 %v1321
        %v1323 = vpop.xlane.xlu0 %1322
        %v1324 = vsel %vm926, %v1208, -inf
        %1325 = vmax.xlane.f32.xlu0 %v1324
        %v1326 = vpop.xlane.xlu0 %1325
        %v1327 = vsel %vm926, %v1256, -inf
        %1328 = vmax.xlane.f32.xlu0 %v1327
        %v1329 = vpop.xlane.xlu0 %1328
        %v1330 = vsel %vm926, %v1304, -inf
        %1331 = vmax.xlane.f32.xlu0 %v1330
        %v1332 = vpop.xlane.xlu0 %1331
        %v1333 = vsub.f32 %v968, %v1311
        %v1334 = vsub.f32 %v1016, %v1314
        %v1335 = vsub.f32 %v1064, %v1317
        %v1336 = vsub.f32 %v1112, %v1320
        %v1337 = vsub.f32 %v1160, %v1323
        %v1338 = vsub.f32 %v1208, %v1326
        %v1339 = vsub.f32 %v1256, %v1329
        %v1340 = vsub.f32 %v1304, %v1332
        %v1341 = vmul.f32 %v1333, 1.442695
        %v1342 = vpow.pop %v1341
        %v1343 = vmul.f32 %v1334, 1.442695
        %v1344 = vpow.pop %v1343
        %v1345 = vmul.f32 %v1335, 1.442695
        %v1346 = vpow.pop %v1345
        %v1347 = vmul.f32 %v1336, 1.442695
        %v1348 = vpow.pop %v1347
        %v1349 = vmul.f32 %v1337, 1.442695
        %v1350 = vpow.pop %v1349
        %v1351 = vmul.f32 %v1338, 1.442695
        %v1352 = vpow.pop %v1351
        %v1353 = vmul.f32 %v1339, 1.442695
        %v1354 = vpow.pop %v1353
        %v1355 = vmul.f32 %v1340, 1.442695
        %v1356 = vpow.pop %v1355
        %v1357 = vsel %vm926, %v1342, 0.0
        %1358 = vadd.xlane.f32.xlu0 %v1357
        %v1359 = vpop.xlane.xlu0 %1358
        %v1360 = vsel %vm926, %v1344, 0.0
        %1361 = vadd.xlane.f32.xlu0 %v1360
        %v1362 = vpop.xlane.xlu0 %1361
        %v1363 = vsel %vm926, %v1346, 0.0
        %1364 = vadd.xlane.f32.xlu0 %v1363
        %v1365 = vpop.xlane.xlu0 %1364
        %v1366 = vsel %vm926, %v1348, 0.0
        %1367 = vadd.xlane.f32.xlu0 %v1366
        %v1368 = vpop.xlane.xlu0 %1367
        %v1369 = vsel %vm926, %v1350, 0.0
        %1370 = vadd.xlane.f32.xlu0 %v1369
        %v1371 = vpop.xlane.xlu0 %1370
        %v1372 = vsel %vm926, %v1352, 0.0
        %1373 = vadd.xlane.f32.xlu0 %v1372
        %v1374 = vpop.xlane.xlu0 %1373
        %v1375 = vsel %vm926, %v1354, 0.0
        %1376 = vadd.xlane.f32.xlu0 %v1375
        %v1377 = vpop.xlane.xlu0 %1376
        %v1378 = vsel %vm926, %v1356, 0.0
        %1379 = vadd.xlane.f32.xlu0 %v1378
        %v1380 = vpop.xlane.xlu0 %1379
        %v1381 = vpack.c.bf16 %v1342, %v1342
        %v1382 = vpack.c.bf16 %v1344, %v1344
        %v1383 = vpack.c.bf16 %v1346, %v1346
        %v1384 = vpack.c.bf16 %v1348, %v1348
        %v1385 = vpack.c.bf16 %v1350, %v1350
        %v1386 = vpack.c.bf16 %v1352, %v1352
        %v1387 = vpack.c.bf16 %v1354, %v1354
        %v1388 = vpack.c.bf16 %v1356, %v1356
        %1389 = vrot.lane.b32.xlu0 %v896, 64
        %v1390 = vpop.permute.xlu0 %1389
        %v1392 = vsel %vm926, %v1381, 0
        %vm1394 = vcmask 1043456
        %v1396 = vsel %vm1394, %v1390, 0
        %1398 = vmatprep.subr.bf16.mxu0 0
        %1399 = vmatpush1.bf16.msra.mxu0 0
        %1400 = vmatprep.subr.bf16.mxu0 0
        %1401 = vmatpush1.bf16.msra.mxu0 0
        %1402 = vmatprep.subr.bf16.mxu0 0
        %1403 = vmatpush1.bf16.msra.mxu0 0
        %1404 = vmatprep.subr.bf16.mxu0 0
        %1405 = vmatpush1.bf16.msra.mxu0 0
        %1406 = vmatprep.subr.bf16.mxu0 0
        %1407 = vmatpush1.bf16.msra.mxu0 0
        %1408 = vmatprep.subr.bf16.mxu0 0
        %1409 = vmatpush1.bf16.msra.mxu0 0
        %1410 = vmatprep.subr.bf16.mxu0 0
        %1411 = vmatpush1.bf16.msra.mxu0 0
        %1412 = vmatprep.subr.bf16.mxu0 0
        %1413 = vmatpush1.bf16.msra.mxu0 %v1396
        %1414 = vmatprep.subr.bf16.mxu0 0
        %1415 = vmatpush2.bf16.msra.mxu0 0
        %1416 = vmatprep.subr.bf16.mxu0 0
        %1417 = vmatpush2.bf16.msra.mxu0 0
        %1418 = vmatprep.subr.bf16.mxu0 0
        %1419 = vmatpush2.bf16.msra.mxu0 0
        %1420 = vmatprep.subr.bf16.mxu0 0
        %1421 = vmatpush2.bf16.msra.mxu0 0
        %1422 = vmatprep.subr.bf16.mxu0 0
        %1423 = vmatpush2.bf16.msra.mxu0 0
        %1424 = vmatprep.subr.bf16.mxu0 0
        %1425 = vmatpush2.bf16.msra.mxu0 0
        %1426 = vmatprep.subr.bf16.mxu0 0
        %1427 = vmatpush2.bf16.msra.mxu0 0
        %1428 = vmatprep.subr.bf16.mxu0 0
        %1429 = vmatpush2.bf16.msra.mxu0 0
        %1430 = vmatprep.mubr.bf16.mxu0 0
        %1431 = vmatmul.mubr.bf16.gmra.mxu0 %v1392
        %v1432 = vpop.f32.mrf.mxu0
        %v1433 = vadd.f32 0.0, %v1432
        %v1434 = vpop.f32.mrf.mxu0
        %v1435 = vpop.f32.mrf.mxu0
        %v1436 = vpop.f32.mrf.mxu0
        %1437 = vdwg.mxu0
        %1438 = vrot.lane.b32.xlu0 %v897, 64
        %v1439 = vpop.permute.xlu0 %1438
        %v1441 = vsel %vm926, %v1382, 0
        %v1444 = vsel %vm1394, %v1439, 0
        %1446 = vmatprep.subr.bf16.mxu0 0
        %1447 = vmatpush1.bf16.msra.mxu0 0
        %1448 = vmatprep.subr.bf16.mxu0 0
        %1449 = vmatpush1.bf16.msra.mxu0 0
        %1450 = vmatprep.subr.bf16.mxu0 0
        %1451 = vmatpush1.bf16.msra.mxu0 0
        %1452 = vmatprep.subr.bf16.mxu0 0
        %1453 = vmatpush1.bf16.msra.mxu0 0
        %1454 = vmatprep.subr.bf16.mxu0 0
        %1455 = vmatpush1.bf16.msra.mxu0 0
        %1456 = vmatprep.subr.bf16.mxu0 0
        %1457 = vmatpush1.bf16.msra.mxu0 0
        %1458 = vmatprep.subr.bf16.mxu0 0
        %1459 = vmatpush1.bf16.msra.mxu0 0
        %1460 = vmatprep.subr.bf16.mxu0 0
        %1461 = vmatpush1.bf16.msra.mxu0 %v1444
        %1462 = vmatprep.subr.bf16.mxu0 0
        %1463 = vmatpush2.bf16.msra.mxu0 0
        %1464 = vmatprep.subr.bf16.mxu0 0
        %1465 = vmatpush2.bf16.msra.mxu0 0
        %1466 = vmatprep.subr.bf16.mxu0 0
        %1467 = vmatpush2.bf16.msra.mxu0 0
        %1468 = vmatprep.subr.bf16.mxu0 0
        %1469 = vmatpush2.bf16.msra.mxu0 0
        %1470 = vmatprep.subr.bf16.mxu0 0
        %1471 = vmatpush2.bf16.msra.mxu0 0
        %1472 = vmatprep.subr.bf16.mxu0 0
        %1473 = vmatpush2.bf16.msra.mxu0 0
        %1474 = vmatprep.subr.bf16.mxu0 0
        %1475 = vmatpush2.bf16.msra.mxu0 0
        %1476 = vmatprep.subr.bf16.mxu0 0
        %1477 = vmatpush2.bf16.msra.mxu0 0
        %1478 = vmatprep.mubr.bf16.mxu0 0
        %1479 = vmatmul.mubr.bf16.gmra.mxu0 %v1441
        %v1480 = vpop.f32.mrf.mxu0
        %v1481 = vadd.f32 0.0, %v1480
        %v1482 = vpop.f32.mrf.mxu0
        %v1483 = vpop.f32.mrf.mxu0
        %v1484 = vpop.f32.mrf.mxu0
        %1485 = vdwg.mxu0
        %1486 = vrot.lane.b32.xlu0 %v901, 64
        %v1487 = vpop.permute.xlu0 %1486
        %v1489 = vsel %vm926, %v1383, 0
        %v1492 = vsel %vm1394, %v1487, 0
        %1494 = vmatprep.subr.bf16.mxu0 0
        %1495 = vmatpush1.bf16.msra.mxu0 0
        %1496 = vmatprep.subr.bf16.mxu0 0
        %1497 = vmatpush1.bf16.msra.mxu0 0
        %1498 = vmatprep.subr.bf16.mxu0 0
        %1499 = vmatpush1.bf16.msra.mxu0 0
        %1500 = vmatprep.subr.bf16.mxu0 0
        %1501 = vmatpush1.bf16.msra.mxu0 0
        %1502 = vmatprep.subr.bf16.mxu0 0
        %1503 = vmatpush1.bf16.msra.mxu0 0
        %1504 = vmatprep.subr.bf16.mxu0 0
        %1505 = vmatpush1.bf16.msra.mxu0 0
        %1506 = vmatprep.subr.bf16.mxu0 0
        %1507 = vmatpush1.bf16.msra.mxu0 0
        %1508 = vmatprep.subr.bf16.mxu0 0
        %1509 = vmatpush1.bf16.msra.mxu0 %v1492
        %1510 = vmatprep.subr.bf16.mxu0 0
        %1511 = vmatpush2.bf16.msra.mxu0 0
        %1512 = vmatprep.subr.bf16.mxu0 0
        %1513 = vmatpush2.bf16.msra.mxu0 0
        %1514 = vmatprep.subr.bf16.mxu0 0
        %1515 = vmatpush2.bf16.msra.mxu0 0
        %1516 = vmatprep.subr.bf16.mxu0 0
        %1517 = vmatpush2.bf16.msra.mxu0 0
        %1518 = vmatprep.subr.bf16.mxu0 0
        %1519 = vmatpush2.bf16.msra.mxu0 0
        %1520 = vmatprep.subr.bf16.mxu0 0
        %1521 = vmatpush2.bf16.msra.mxu0 0
        %1522 = vmatprep.subr.bf16.mxu0 0
        %1523 = vmatpush2.bf16.msra.mxu0 0
        %1524 = vmatprep.subr.bf16.mxu0 0
        %1525 = vmatpush2.bf16.msra.mxu0 0
        %1526 = vmatprep.mubr.bf16.mxu0 0
        %1527 = vmatmul.mubr.bf16.gmra.mxu0 %v1489
        %v1528 = vpop.f32.mrf.mxu0
        %v1529 = vadd.f32 0.0, %v1528
        %v1530 = vpop.f32.mrf.mxu0
        %v1531 = vpop.f32.mrf.mxu0
        %v1532 = vpop.f32.mrf.mxu0
        %1533 = vdwg.mxu0
        %1534 = vrot.lane.b32.xlu0 %v903, 64
        %v1535 = vpop.permute.xlu0 %1534
        %v1537 = vsel %vm926, %v1384, 0
        %v1540 = vsel %vm1394, %v1535, 0
        %1542 = vmatprep.subr.bf16.mxu0 0
        %1543 = vmatpush1.bf16.msra.mxu0 0
        %1544 = vmatprep.subr.bf16.mxu0 0
        %1545 = vmatpush1.bf16.msra.mxu0 0
        %1546 = vmatprep.subr.bf16.mxu0 0
        %1547 = vmatpush1.bf16.msra.mxu0 0
        %1548 = vmatprep.subr.bf16.mxu0 0
        %1549 = vmatpush1.bf16.msra.mxu0 0
        %1550 = vmatprep.subr.bf16.mxu0 0
        %1551 = vmatpush1.bf16.msra.mxu0 0
        %1552 = vmatprep.subr.bf16.mxu0 0
        %1553 = vmatpush1.bf16.msra.mxu0 0
        %1554 = vmatprep.subr.bf16.mxu0 0
        %1555 = vmatpush1.bf16.msra.mxu0 0
        %1556 = vmatprep.subr.bf16.mxu0 0
        %1557 = vmatpush1.bf16.msra.mxu0 %v1540
        %1558 = vmatprep.subr.bf16.mxu0 0
        %1559 = vmatpush2.bf16.msra.mxu0 0
        %1560 = vmatprep.subr.bf16.mxu0 0
        %1561 = vmatpush2.bf16.msra.mxu0 0
        %1562 = vmatprep.subr.bf16.mxu0 0
        %1563 = vmatpush2.bf16.msra.mxu0 0
        %1564 = vmatprep.subr.bf16.mxu0 0
        %1565 = vmatpush2.bf16.msra.mxu0 0
        %1566 = vmatprep.subr.bf16.mxu0 0
        %1567 = vmatpush2.bf16.msra.mxu0 0
        %1568 = vmatprep.subr.bf16.mxu0 0
        %1569 = vmatpush2.bf16.msra.mxu0 0
        %1570 = vmatprep.subr.bf16.mxu0 0
        %1571 = vmatpush2.bf16.msra.mxu0 0
        %1572 = vmatprep.subr.bf16.mxu0 0
        %1573 = vmatpush2.bf16.msra.mxu0 0
        %1574 = vmatprep.mubr.bf16.mxu0 0
        %1575 = vmatmul.mubr.bf16.gmra.mxu0 %v1537
        %v1576 = vpop.f32.mrf.mxu0
        %v1577 = vadd.f32 0.0, %v1576
        %v1578 = vpop.f32.mrf.mxu0
        %v1579 = vpop.f32.mrf.mxu0
        %v1580 = vpop.f32.mrf.mxu0
        %1581 = vdwg.mxu0
        %1582 = vrot.lane.b32.xlu0 %v905, 64
        %v1583 = vpop.permute.xlu0 %1582
        %v1585 = vsel %vm926, %v1385, 0
        %v1588 = vsel %vm1394, %v1583, 0
        %1590 = vmatprep.subr.bf16.mxu0 0
        %1591 = vmatpush1.bf16.msra.mxu0 0
        %1592 = vmatprep.subr.bf16.mxu0 0
        %1593 = vmatpush1.bf16.msra.mxu0 0
        %1594 = vmatprep.subr.bf16.mxu0 0
        %1595 = vmatpush1.bf16.msra.mxu0 0
        %1596 = vmatprep.subr.bf16.mxu0 0
        %1597 = vmatpush1.bf16.msra.mxu0 0
        %1598 = vmatprep.subr.bf16.mxu0 0
        %1599 = vmatpush1.bf16.msra.mxu0 0
        %1600 = vmatprep.subr.bf16.mxu0 0
        %1601 = vmatpush1.bf16.msra.mxu0 0
        %1602 = vmatprep.subr.bf16.mxu0 0
        %1603 = vmatpush1.bf16.msra.mxu0 0
        %1604 = vmatprep.subr.bf16.mxu0 0
        %1605 = vmatpush1.bf16.msra.mxu0 %v1588
        %1606 = vmatprep.subr.bf16.mxu0 0
        %1607 = vmatpush2.bf16.msra.mxu0 0
        %1608 = vmatprep.subr.bf16.mxu0 0
        %1609 = vmatpush2.bf16.msra.mxu0 0
        %1610 = vmatprep.subr.bf16.mxu0 0
        %1611 = vmatpush2.bf16.msra.mxu0 0
        %1612 = vmatprep.subr.bf16.mxu0 0
        %1613 = vmatpush2.bf16.msra.mxu0 0
        %1614 = vmatprep.subr.bf16.mxu0 0
        %1615 = vmatpush2.bf16.msra.mxu0 0
        %1616 = vmatprep.subr.bf16.mxu0 0
        %1617 = vmatpush2.bf16.msra.mxu0 0
        %1618 = vmatprep.subr.bf16.mxu0 0
        %1619 = vmatpush2.bf16.msra.mxu0 0
        %1620 = vmatprep.subr.bf16.mxu0 0
        %1621 = vmatpush2.bf16.msra.mxu0 0
        %1622 = vmatprep.mubr.bf16.mxu0 0
        %1623 = vmatmul.mubr.bf16.gmra.mxu0 %v1585
        %v1624 = vpop.f32.mrf.mxu0
        %v1625 = vadd.f32 0.0, %v1624
        %v1626 = vpop.f32.mrf.mxu0
        %v1627 = vpop.f32.mrf.mxu0
        %v1628 = vpop.f32.mrf.mxu0
        %1629 = vdwg.mxu0
        %1630 = vrot.lane.b32.xlu0 %v907, 64
        %v1631 = vpop.permute.xlu0 %1630
        %v1633 = vsel %vm926, %v1386, 0
        %v1636 = vsel %vm1394, %v1631, 0
        %1638 = vmatprep.subr.bf16.mxu0 0
        %1639 = vmatpush1.bf16.msra.mxu0 0
        %1640 = vmatprep.subr.bf16.mxu0 0
        %1641 = vmatpush1.bf16.msra.mxu0 0
        %1642 = vmatprep.subr.bf16.mxu0 0
        %1643 = vmatpush1.bf16.msra.mxu0 0
        %1644 = vmatprep.subr.bf16.mxu0 0
        %1645 = vmatpush1.bf16.msra.mxu0 0
        %1646 = vmatprep.subr.bf16.mxu0 0
        %1647 = vmatpush1.bf16.msra.mxu0 0
        %1648 = vmatprep.subr.bf16.mxu0 0
        %1649 = vmatpush1.bf16.msra.mxu0 0
        %1650 = vmatprep.subr.bf16.mxu0 0
        %1651 = vmatpush1.bf16.msra.mxu0 0
        %1652 = vmatprep.subr.bf16.mxu0 0
        %1653 = vmatpush1.bf16.msra.mxu0 %v1636
        %1654 = vmatprep.subr.bf16.mxu0 0
        %1655 = vmatpush2.bf16.msra.mxu0 0
        %1656 = vmatprep.subr.bf16.mxu0 0
        %1657 = vmatpush2.bf16.msra.mxu0 0
        %1658 = vmatprep.subr.bf16.mxu0 0
        %1659 = vmatpush2.bf16.msra.mxu0 0
        %1660 = vmatprep.subr.bf16.mxu0 0
        %1661 = vmatpush2.bf16.msra.mxu0 0
        %1662 = vmatprep.subr.bf16.mxu0 0
        %1663 = vmatpush2.bf16.msra.mxu0 0
        %1664 = vmatprep.subr.bf16.mxu0 0
        %1665 = vmatpush2.bf16.msra.mxu0 0
        %1666 = vmatprep.subr.bf16.mxu0 0
        %1667 = vmatpush2.bf16.msra.mxu0 0
        %1668 = vmatprep.subr.bf16.mxu0 0
        %1669 = vmatpush2.bf16.msra.mxu0 0
        %1670 = vmatprep.mubr.bf16.mxu0 0
        %1671 = vmatmul.mubr.bf16.gmra.mxu0 %v1633
        %v1672 = vpop.f32.mrf.mxu0
        %v1673 = vadd.f32 0.0, %v1672
        %v1674 = vpop.f32.mrf.mxu0
        %v1675 = vpop.f32.mrf.mxu0
        %v1676 = vpop.f32.mrf.mxu0
        %1677 = vdwg.mxu0
        %1678 = vrot.lane.b32.xlu0 %v909, 64
        %v1679 = vpop.permute.xlu0 %1678
        %v1681 = vsel %vm926, %v1387, 0
        %v1684 = vsel %vm1394, %v1679, 0
        %1686 = vmatprep.subr.bf16.mxu0 0
        %1687 = vmatpush1.bf16.msra.mxu0 0
        %1688 = vmatprep.subr.bf16.mxu0 0
        %1689 = vmatpush1.bf16.msra.mxu0 0
        %1690 = vmatprep.subr.bf16.mxu0 0
        %1691 = vmatpush1.bf16.msra.mxu0 0
        %1692 = vmatprep.subr.bf16.mxu0 0
        %1693 = vmatpush1.bf16.msra.mxu0 0
        %1694 = vmatprep.subr.bf16.mxu0 0
        %1695 = vmatpush1.bf16.msra.mxu0 0
        %1696 = vmatprep.subr.bf16.mxu0 0
        %1697 = vmatpush1.bf16.msra.mxu0 0
        %1698 = vmatprep.subr.bf16.mxu0 0
        %1699 = vmatpush1.bf16.msra.mxu0 0
        %1700 = vmatprep.subr.bf16.mxu0 0
        %1701 = vmatpush1.bf16.msra.mxu0 %v1684
        %1702 = vmatprep.subr.bf16.mxu0 0
        %1703 = vmatpush2.bf16.msra.mxu0 0
        %1704 = vmatprep.subr.bf16.mxu0 0
        %1705 = vmatpush2.bf16.msra.mxu0 0
        %1706 = vmatprep.subr.bf16.mxu0 0
        %1707 = vmatpush2.bf16.msra.mxu0 0
        %1708 = vmatprep.subr.bf16.mxu0 0
        %1709 = vmatpush2.bf16.msra.mxu0 0
        %1710 = vmatprep.subr.bf16.mxu0 0
        %1711 = vmatpush2.bf16.msra.mxu0 0
        %1712 = vmatprep.subr.bf16.mxu0 0
        %1713 = vmatpush2.bf16.msra.mxu0 0
        %1714 = vmatprep.subr.bf16.mxu0 0
        %1715 = vmatpush2.bf16.msra.mxu0 0
        %1716 = vmatprep.subr.bf16.mxu0 0
        %1717 = vmatpush2.bf16.msra.mxu0 0
        %1718 = vmatprep.mubr.bf16.mxu0 0
        %1719 = vmatmul.mubr.bf16.gmra.mxu0 %v1681
        %v1720 = vpop.f32.mrf.mxu0
        %v1721 = vadd.f32 0.0, %v1720
        %v1722 = vpop.f32.mrf.mxu0
        %v1723 = vpop.f32.mrf.mxu0
        %v1724 = vpop.f32.mrf.mxu0
        %1725 = vdwg.mxu0
        %1726 = vrot.lane.b32.xlu0 %v911, 64
        %v1727 = vpop.permute.xlu0 %1726
        %v1729 = vsel %vm926, %v1388, 0
        %v1732 = vsel %vm1394, %v1727, 0
        %1734 = vmatprep.subr.bf16.mxu0 0
        %1735 = vmatpush1.bf16.msra.mxu0 0
        %1736 = vmatprep.subr.bf16.mxu0 0
        %1737 = vmatpush1.bf16.msra.mxu0 0
        %1738 = vmatprep.subr.bf16.mxu0 0
        %1739 = vmatpush1.bf16.msra.mxu0 0
        %1740 = vmatprep.subr.bf16.mxu0 0
        %1741 = vmatpush1.bf16.msra.mxu0 0
        %1742 = vmatprep.subr.bf16.mxu0 0
        %1743 = vmatpush1.bf16.msra.mxu0 0
        %1744 = vmatprep.subr.bf16.mxu0 0
        %1745 = vmatpush1.bf16.msra.mxu0 0
        %1746 = vmatprep.subr.bf16.mxu0 0
        %1747 = vmatpush1.bf16.msra.mxu0 0
        %1748 = vmatprep.subr.bf16.mxu0 0
        %1749 = vmatpush1.bf16.msra.mxu0 %v1732
        %1750 = vmatprep.subr.bf16.mxu0 0
        %1751 = vmatpush2.bf16.msra.mxu0 0
        %1752 = vmatprep.subr.bf16.mxu0 0
        %1753 = vmatpush2.bf16.msra.mxu0 0
        %1754 = vmatprep.subr.bf16.mxu0 0
        %1755 = vmatpush2.bf16.msra.mxu0 0
        %1756 = vmatprep.subr.bf16.mxu0 0
        %1757 = vmatpush2.bf16.msra.mxu0 0
        %1758 = vmatprep.subr.bf16.mxu0 0
        %1759 = vmatpush2.bf16.msra.mxu0 0
        %1760 = vmatprep.subr.bf16.mxu0 0
        %1761 = vmatpush2.bf16.msra.mxu0 0
        %1762 = vmatprep.subr.bf16.mxu0 0
        %1763 = vmatpush2.bf16.msra.mxu0 0
        %1764 = vmatprep.subr.bf16.mxu0 0
        %1765 = vmatpush2.bf16.msra.mxu0 0
        %1766 = vmatprep.mubr.bf16.mxu0 0
        %1767 = vmatmul.mubr.bf16.gmra.mxu0 %v1729
        %v1768 = vpop.f32.mrf.mxu0
        %v1769 = vadd.f32 0.0, %v1768
        %v1770 = vpop.f32.mrf.mxu0
        %v1771 = vpop.f32.mrf.mxu0
        %v1772 = vpop.f32.mrf.mxu0
        %1773 = vdwg.mxu0
        %v1774 = vrcp.pop %v1359
        %v1775 = vrcp.pop %v1362
        %v1776 = vrcp.pop %v1365
        %v1777 = vrcp.pop %v1368
        %v1778 = vrcp.pop %v1371
        %v1779 = vrcp.pop %v1374
        %v1780 = vrcp.pop %v1377
        %v1781 = vrcp.pop %v1380
        %v1782 = vmul.f32 %v1433, %v1774
        %v1783 = vmul.f32 %v1481, %v1775
        %v1784 = vmul.f32 %v1529, %v1776
        %v1785 = vmul.f32 %v1577, %v1777
        %v1786 = vmul.f32 %v1625, %v1778
        %v1787 = vmul.f32 %v1673, %v1779
        %v1788 = vmul.f32 %v1721, %v1780
        %v1789 = vmul.f32 %v1769, %v1781
        %1792 = vrot.lane.b32.xlu0 %v1784, 8
        %v1793 = vpop.permute.xlu0 %1792
        %1794 = vrot.lane.b32.xlu0 %v1785, 8
        %v1795 = vpop.permute.xlu0 %1794
        %1800 = vrot.lane.b32.xlu0 %v1786, 16
        %v1801 = vpop.permute.xlu0 %1800
        %1802 = vrot.lane.b32.xlu0 %v1787, 16
        %v1803 = vpop.permute.xlu0 %1802
        %1808 = vrot.lane.b32.xlu0 %v1788, 24
        %v1809 = vpop.permute.xlu0 %1808
        %1810 = vrot.lane.b32.xlu0 %v1789, 24
        %v1811 = vpop.permute.xlu0 %1810
        %v1814 = vsel %vm926, %v1782, %v1793
        %v1815 = vsel %vm926, %v1783, %v1795
        %vm1816 = vcmask 130048
        %v1817 = vsel %vm1816, %v1814, %v1801
        %v1818 = vsel %vm1816, %v1815, %v1803
        %vm1819 = vcmask 195584
        %v1820 = vsel %vm1819, %v1817, %v1809
        %v1821 = vsel %vm1819, %v1818, %v1811
        %v1822 = vpack.c.bf16 %v1821, %v1820
        %v1823 = vld [vmem:[%s719] sm:$0xf]
        %v1824 = vld [vmem:[%s719 + $0x4] sm:$0xf]
        %v1825 = vld [vmem:[%s719 + $0x8] sm:$0xf]
        %v1826 = vld [vmem:[%s719 + $0xc] sm:$0xf]
        %v1827 = vld [vmem:[%s722] sm:$0x1]
        %v1829 = vlaneseq
        %v1830 = vshrl.u32 %v1829, 7
        %v1831 = vsub.s32 0, %v1830
        %v1832 = vrot.slane %v1827, %v1831
        %v1838 = vunpack.c.l.b16 %v1823
        %v1839 = vunpack.c.l.b16 %v1824
        %v1840 = vunpack.c.l.b16 %v1825
        %v1841 = vunpack.c.l.b16 %v1826
        %v1842 = vpack.c.b16 %v1839, %v1838
        %v1843 = vpack.c.b16 %v1841, %v1840
        %v1847 = vsel %vm766, %v1822, 0
        %1849 = vmatprep.subr.bf16.mxu0 0
        %1850 = vmatpush1.bf16.msra.mxu0 0
        %1851 = vmatprep.subr.bf16.mxu0 0
        %1852 = vmatpush1.bf16.msra.mxu0 0
        %1853 = vmatprep.subr.bf16.mxu0 0
        %1854 = vmatpush1.bf16.msra.mxu0 0
        %1855 = vmatprep.subr.bf16.mxu0 0
        %1856 = vmatpush1.bf16.msra.mxu0 0
        %1857 = vmatprep.subr.bf16.mxu0 0
        %1858 = vmatpush1.bf16.msra.mxu0 0
        %1859 = vmatprep.subr.bf16.mxu0 0
        %1860 = vmatpush1.bf16.msra.mxu0 0
        %1861 = vmatprep.subr.bf16.mxu0 0
        %1862 = vmatpush1.bf16.msra.mxu0 %v1843
        %1863 = vmatprep.subr.bf16.mxu0 0
        %1864 = vmatpush1.bf16.msra.mxu0 %v1842
        %1865 = vmatprep.subr.bf16.mxu0 0
        %1866 = vmatpush2.bf16.msra.mxu0 0
        %1867 = vmatprep.subr.bf16.mxu0 0
        %1868 = vmatpush2.bf16.msra.mxu0 0
        %1869 = vmatprep.subr.bf16.mxu0 0
        %1870 = vmatpush2.bf16.msra.mxu0 0
        %1871 = vmatprep.subr.bf16.mxu0 0
        %1872 = vmatpush2.bf16.msra.mxu0 0
        %1873 = vmatprep.subr.bf16.mxu0 0
        %1874 = vmatpush2.bf16.msra.mxu0 0
        %1875 = vmatprep.subr.bf16.mxu0 0
        %1876 = vmatpush2.bf16.msra.mxu0 0
        %1877 = vmatprep.subr.bf16.mxu0 0
        %1878 = vmatpush2.bf16.msra.mxu0 0
        %1879 = vmatprep.subr.bf16.mxu0 0
        %1880 = vmatpush2.bf16.msra.mxu0 0
        %1881 = vmatprep.mubr.bf16.mxu0 0
        %1882 = vmatmul.mubr.bf16.gmra.mxu0 %v1847
        %v1883 = vpop.f32.mrf.mxu0
        %v1884 = vadd.f32 %v1832, %v1883
        %v1885 = vpop.f32.mrf.mxu0
        %v1886 = vpop.f32.mrf.mxu0
        %v1887 = vadd.f32 %v1832, %v1886
        %v1888 = vpop.f32.mrf.mxu0
        %1889 = vdwg.mxu0
        %v1890 = vadd.f32 %v756, %v1884
        %v1891 = vadd.f32 %v757, %v1887
        %v1892 = vld [vmem:[%s725] sm:$0x1]
        %v1893 = vld [vmem:[%s728] sm:$0x1]
        %v1894 = vsel %vm766, %v1890, 0.0
        %1895 = vadd.xlane.f32.xlu0 %v1894
        %v1896 = vpop.xlane.xlu0 %1895
        %v1897 = vsel %vm766, %v1891, 0.0
        %1898 = vadd.xlane.f32.xlu0 %v1897
        %v1899 = vpop.xlane.xlu0 %1898
        %v1900 = vmul.f32 %v1896, %v773
        %v1901 = vmul.f32 %v1899, %v773
        %v1902 = vsub.f32 %v1890, %v1900
        %v1903 = vsub.f32 %v1891, %v1901
        %v1904 = vmul.f32 %v1902, %v1902
        %v1905 = vmul.f32 %v1903, %v1903
        %v1906 = vsel %vm766, %v1904, 0.0
        %1907 = vadd.xlane.f32.xlu0 %v1906
        %v1908 = vpop.xlane.xlu0 %1907
        %v1909 = vsel %vm766, %v1905, 0.0
        %1910 = vadd.xlane.f32.xlu0 %v1909
        %v1911 = vpop.xlane.xlu0 %1910
        %v1912 = vmul.f32 %v1908, %v773
        %v1913 = vmul.f32 %v1911, %v773
        %v1914 = vadd.f32 %v1912, 1e-05
        %v1915 = vadd.f32 %v1913, 1e-05
        %v1916 = vrsqrt.pop %v1914
        %v1917 = vrsqrt.pop %v1915
        %v1918 = vmul.f32 %v1902, %v1916
        %v1919 = vmul.f32 %v1903, %v1917
        %v1921 = vlaneseq
        %v1922 = vshrl.u32 %v1921, 7
        %v1923 = vsub.s32 0, %v1922
        %v1924 = vrot.slane %v1892, %v1923
        %v1926 = vmul.f32 %v1918, %v1924
        %v1927 = vmul.f32 %v1919, %v1924
        %v1929 = vlaneseq
        %v1930 = vshrl.u32 %v1929, 7
        %v1931 = vsub.s32 0, %v1930
        %v1932 = vrot.slane %v1893, %v1931
        %v1934 = vadd.f32 %v1926, %v1932
        %v1935 = vadd.f32 %v1927, %v1932
        %v1936 = vpack.c.bf16 %v1935, %v1934
        %v1937 = vld [vmem:[%s733] sm:$0xf]
        %v1938 = vld [vmem:[%s733 + $0x4] sm:$0xf]
        %v1939 = vld [vmem:[%s733 + $0x8] sm:$0xf]
        %v1940 = vld [vmem:[%s733 + $0xc] sm:$0xf]
        %v1941 = vld [vmem:[%s736] sm:$0x1]
        %v1943 = vlaneseq
        %v1944 = vshrl.u32 %v1943, 7
        %v1945 = vsub.s32 0, %v1944
        %v1946 = vrot.slane %v1941, %v1945
        %v1952 = vunpack.c.l.b16 %v1937
        %v1953 = vunpack.c.l.b16 %v1938
        %v1954 = vunpack.c.l.b16 %v1939
        %v1955 = vunpack.c.l.b16 %v1940
        %v1956 = vpack.c.b16 %v1953, %v1952
        %v1957 = vpack.c.b16 %v1955, %v1954
        %v1961 = vsel %vm766, %v1936, 0
        %1963 = vmatprep.subr.bf16.mxu0 0
        %1964 = vmatpush1.bf16.msra.mxu0 0
        %1965 = vmatprep.subr.bf16.mxu0 0
        %1966 = vmatpush1.bf16.msra.mxu0 0
        %1967 = vmatprep.subr.bf16.mxu0 0
        %1968 = vmatpush1.bf16.msra.mxu0 0
        %1969 = vmatprep.subr.bf16.mxu0 0
        %1970 = vmatpush1.bf16.msra.mxu0 0
        %1971 = vmatprep.subr.bf16.mxu0 0
        %1972 = vmatpush1.bf16.msra.mxu0 0
        %1973 = vmatprep.subr.bf16.mxu0 0
        %1974 = vmatpush1.bf16.msra.mxu0 0
        %1975 = vmatprep.subr.bf16.mxu0 0
        %1976 = vmatpush1.bf16.msra.mxu0 %v1957
        %1977 = vmatprep.subr.bf16.mxu0 0
        %1978 = vmatpush1.bf16.msra.mxu0 %v1956
        %1979 = vmatprep.subr.bf16.mxu0 0
        %1980 = vmatpush2.bf16.msra.mxu0 0
        %1981 = vmatprep.subr.bf16.mxu0 0
        %1982 = vmatpush2.bf16.msra.mxu0 0
        %1983 = vmatprep.subr.bf16.mxu0 0
        %1984 = vmatpush2.bf16.msra.mxu0 0
        %1985 = vmatprep.subr.bf16.mxu0 0
        %1986 = vmatpush2.bf16.msra.mxu0 0
        %1987 = vmatprep.subr.bf16.mxu0 0
        %1988 = vmatpush2.bf16.msra.mxu0 0
        %1989 = vmatprep.subr.bf16.mxu0 0
        %1990 = vmatpush2.bf16.msra.mxu0 0
        %1991 = vmatprep.subr.bf16.mxu0 0
        %1992 = vmatpush2.bf16.msra.mxu0 0
        %1993 = vmatprep.subr.bf16.mxu0 0
        %1994 = vmatpush2.bf16.msra.mxu0 0
        %1995 = vmatprep.mubr.bf16.mxu0 0
        %1996 = vmatmul.mubr.bf16.gmra.mxu0 %v1961
        %v1997 = vpop.f32.mrf.mxu0
        %v1998 = vadd.f32 %v1946, %v1997
        %v1999 = vpop.f32.mrf.mxu0
        %v2000 = vpop.f32.mrf.mxu0
        %v2001 = vadd.f32 %v1946, %v2000
        %v2002 = vpop.f32.mrf.mxu0
        %2003 = vdwg.mxu0
        %v2004 = vmax.f32 %v1998, 0.0
        %v2005 = vmax.f32 %v2001, 0.0
        %v2006 = vpack.c.bf16 %v2005, %v2004
        %v2007 = vld [vmem:[%s741] sm:$0xf]
        %v2008 = vld [vmem:[%s741 + $0x4] sm:$0xf]
        %v2009 = vld [vmem:[%s741 + $0x8] sm:$0xf]
        %v2010 = vld [vmem:[%s741 + $0xc] sm:$0xf]
        %v2011 = vld [vmem:[%s741 + $0x10] sm:$0xf]
        %v2012 = vld [vmem:[%s741 + $0x14] sm:$0xf]
        %v2013 = vld [vmem:[%s741 + $0x18] sm:$0xf]
        %v2014 = vld [vmem:[%s741 + $0x1c] sm:$0xf]
        %v2015 = vld [vmem:[%s744] sm:$0x1]
        %v2017 = vlaneseq
        %v2018 = vshrl.u32 %v2017, 7
        %v2019 = vsub.s32 0, %v2018
        %v2020 = vrot.slane %v2015, %v2019
        %v2030 = vunpack.c.l.b16 %v2007
        %v2031 = vunpack.c.l.b16 %v2008
        %v2032 = vunpack.c.l.b16 %v2009
        %v2033 = vunpack.c.l.b16 %v2010
        %v2034 = vunpack.c.l.b16 %v2011
        %v2035 = vunpack.c.l.b16 %v2012
        %v2036 = vunpack.c.l.b16 %v2013
        %v2037 = vunpack.c.l.b16 %v2014
        %v2038 = vpack.c.b16 %v2031, %v2030
        %v2039 = vpack.c.b16 %v2033, %v2032
        %v2040 = vpack.c.b16 %v2035, %v2034
        %v2041 = vpack.c.b16 %v2037, %v2036
        %vm2046 = vcmask 523264
        %v2048 = vsel %vm2046, %v2006, 0
        %2050 = vmatprep.subr.bf16.mxu0 0
        %2051 = vmatpush1.bf16.msra.mxu0 0
        %2052 = vmatprep.subr.bf16.mxu0 0
        %2053 = vmatpush1.bf16.msra.mxu0 0
        %2054 = vmatprep.subr.bf16.mxu0 0
        %2055 = vmatpush1.bf16.msra.mxu0 0
        %2056 = vmatprep.subr.bf16.mxu0 0
        %2057 = vmatpush1.bf16.msra.mxu0 0
        %2058 = vmatprep.subr.bf16.mxu0 0
        %2059 = vmatpush1.bf16.msra.mxu0 %v2041
        %2060 = vmatprep.subr.bf16.mxu0 0
        %2061 = vmatpush1.bf16.msra.mxu0 %v2040
        %2062 = vmatprep.subr.bf16.mxu0 0
        %2063 = vmatpush1.bf16.msra.mxu0 %v2039
        %2064 = vmatprep.subr.bf16.mxu0 0
        %2065 = vmatpush1.bf16.msra.mxu0 %v2038
        %2066 = vmatprep.subr.bf16.mxu0 0
        %2067 = vmatpush2.bf16.msra.mxu0 0
        %2068 = vmatprep.subr.bf16.mxu0 0
        %2069 = vmatpush2.bf16.msra.mxu0 0
        %2070 = vmatprep.subr.bf16.mxu0 0
        %2071 = vmatpush2.bf16.msra.mxu0 0
        %2072 = vmatprep.subr.bf16.mxu0 0
        %2073 = vmatpush2.bf16.msra.mxu0 0
        %2074 = vmatprep.subr.bf16.mxu0 0
        %2075 = vmatpush2.bf16.msra.mxu0 0
        %2076 = vmatprep.subr.bf16.mxu0 0
        %2077 = vmatpush2.bf16.msra.mxu0 0
        %2078 = vmatprep.subr.bf16.mxu0 0
        %2079 = vmatpush2.bf16.msra.mxu0 0
        %2080 = vmatprep.subr.bf16.mxu0 0
        %2081 = vmatpush2.bf16.msra.mxu0 0
        %2082 = vmatprep.mubr.bf16.mxu0 0
        %2083 = vmatmul.mubr.bf16.gmra.mxu0 %v2048
        %v2084 = vpop.f32.mrf.mxu0
        %v2085 = vadd.f32 %v2020, %v2084
        %v2086 = vpop.f32.mrf.mxu0
        %v2087 = vpop.f32.mrf.mxu0
        %v2088 = vadd.f32 %v2020, %v2087
        %v2089 = vpop.f32.mrf.mxu0
        %2090 = vdwg.mxu0
        %v2091 = vadd.f32 %v1890, %v2085
        %v2092 = vadd.f32 %v1891, %v2088
        %2093 = vst.msk [vmem:[#allocation2] sm:$0xff] %vm766, %v2091
        %2094 = vst.msk [vmem:[#allocation2 + $0x8] sm:$0xff] %vm766, %v2092
        %p2095 = scmp.eq.s32.totalorder %s35, 1
        // Predicated region
        $region97: #{tpu_custom_call.1} parent=83 // pred_check
          %p2096 = pneg %p2095
        $region98: #{tpu_custom_call.1} parent=83 // pred_check_branch
          %2098 = sbr.rel (%p2096) target = $region100
        $region99: #{tpu_custom_call.1} parent=83 // pred_region
          %v2099 = vld [vmem:[%s14] sm:$0x1]
          %v2100 = vld [vmem:[%s15] sm:$0x1]
          %v2101 = vsel %vm766, %v2091, 0.0
          %2102 = vadd.xlane.f32.xlu0 %v2101
          %v2103 = vpop.xlane.xlu0 %2102
          %v2104 = vsel %vm766, %v2092, 0.0
          %2105 = vadd.xlane.f32.xlu0 %v2104
          %v2106 = vpop.xlane.xlu0 %2105
          %v2107 = vmul.f32 %v2103, %v773
          %v2108 = vmul.f32 %v2106, %v773
          %v2109 = vsub.f32 %v2091, %v2107
          %v2110 = vsub.f32 %v2092, %v2108
          %v2111 = vmul.f32 %v2109, %v2109
          %v2112 = vmul.f32 %v2110, %v2110
          %v2113 = vsel %vm766, %v2111, 0.0
          %2114 = vadd.xlane.f32.xlu0 %v2113
          %v2115 = vpop.xlane.xlu0 %2114
          %v2116 = vsel %vm766, %v2112, 0.0
          %2117 = vadd.xlane.f32.xlu0 %v2116
          %v2118 = vpop.xlane.xlu0 %2117
          %v2119 = vmul.f32 %v2115, %v773
          %v2120 = vmul.f32 %v2118, %v773
          %v2121 = vadd.f32 %v2119, 1e-05
          %v2122 = vadd.f32 %v2120, 1e-05
          %v2123 = vrsqrt.pop %v2121
          %v2124 = vrsqrt.pop %v2122
          %v2125 = vmul.f32 %v2109, %v2123
          %v2126 = vmul.f32 %v2110, %v2124
          %v2128 = vlaneseq
          %v2129 = vshrl.u32 %v2128, 7
          %v2130 = vsub.s32 0, %v2129
          %v2131 = vrot.slane %v2099, %v2130
          %v2133 = vmul.f32 %v2125, %v2131
          %v2134 = vmul.f32 %v2126, %v2131
          %v2136 = vlaneseq
          %v2137 = vshrl.u32 %v2136, 7
          %v2138 = vsub.s32 0, %v2137
          %v2139 = vrot.slane %v2100, %v2138
          %v2141 = vadd.f32 %v2133, %v2139
          %v2142 = vadd.f32 %v2134, %v2139
          %2143 = vst.msk [vmem:[#allocation8] sm:$0xff] %vm766, %v2141
          %2144 = vst.msk [vmem:[#allocation8 + $0x8] sm:$0xff] %vm766, %v2142
        $region100: #{tpu_custom_call.1} parent=83 // pred_fallthru
          _
        // Predicated region
        $region101: #{tpu_custom_call.1} parent=83 // pred_check
          %p2145 = pneg %p466
        $region102: #{tpu_custom_call.1} parent=83 // pred_check_branch
          %2147 = sbr.rel (%p2145) target = $region104
        $region103: #{tpu_custom_call.1} parent=83 // pred_region
          %s2148 = smul.u32 2, %s34
          %s2150 = ssub.s32 256, 256
          %2151 = vsyncadd [#allocation5], %s2150
          %s2152 = smul.addr %s2148, 128
          %s2153 = scalar_lea.hbm %s16, %s2152
          %s2154 = sshll.u32 [#allocation8], 4
          %s2155 = int_to_ptr.vmem [resolvable:$true] %s2154
          %2160 = dma.vmem_to_hbm [thread:$0]  %s2155, 256, %s2153, [#allocation5], 128, 128, 8
        $region104: #{tpu_custom_call.1} parent=83 // pred_fallthru
          _
        // Predicated region
        $region105: #{tpu_custom_call.1} parent=83 // pred_check
          %p2161 = pneg %p466
        $region106: #{tpu_custom_call.1} parent=83 // pred_check_branch
          %2163 = sbr.rel (%p2161) target = $region108
        $region107: #{tpu_custom_call.1} parent=83 // pred_region
          %2164 = dma.done [#allocation5], 256
        $region108: #{tpu_custom_call.1} parent=83 // pred_fallthru
          _
      $region84: #{tpu_custom_call.1} parent=5 // pred_fallthru
        _
      %p2165 = scmp.le.s32.totalorder 2, %s25
      // Predicated region
      $region109: #{tpu_custom_call.1} parent=5 // pred_check
        %p2166 = pneg %p2165
      $region110: #{tpu_custom_call.1} parent=5 // pred_check_branch
        %2168 = sbr.rel (%p2166) target = $region112
      $region111: #{tpu_custom_call.1} parent=5 // pred_region
        %s2169 = ssub.s32 %s25, 2
      $region112: #{tpu_custom_call.1} parent=5 // pred_fallthru
        _
    $region6: #{tpu_custom_call.1} parent=1 // loop_footer
      %s29 = sadd.s32 1, %s25
    $region7: #{tpu_custom_call.1} parent=1 // loop_footer_branch
      %24 = sbr.rel target = $region3
    $region8: #{tpu_custom_call.1} parent=1 // loop_exit
      _
    %2170 = vsyncpa [#allocation4], 1
    %s2171 = scalar_lea.sflag [#allocation4], 1
    %2172 = vsyncpa %s2171, 1
    %2173 = vsyncpa [#allocation7], 1
    %2174 = vsyncpa [#allocation5], 1
    %s2175 = scalar_lea.sflag [#allocation5], 1
    %2176 = vsyncpa %s2175, 1

</llo_original>
